<compile_context>
chip_gen: v6e
topology: v6e:2x2x1
jax: 0.10.0
libtpu: 0.0.40
codegen_flags: <defaults>
</compile_context>

<pallas_src>
import functools

import jax
import jax.numpy as jnp
from jax import lax
from jax.experimental import pallas as pl
from jax.experimental.pallas import tpu as pltpu

SQRT1_2 = 0.70710678118654752440


def _erf(x):
    # Abramowitz & Stegun 7.1.26: only exp/mul/div/select, lowers cleanly.
    a1, a2, a3, a4, a5 = 0.254829592, -0.284496736, 1.421413741, -1.453152027, 1.061405429
    p = 0.3275911
    s = jnp.where(x >= 0.0, 1.0, -1.0)
    ax = jnp.abs(x)
    t = 1.0 / (1.0 + p * ax)
    poly = ((((a5 * t + a4) * t + a3) * t + a2) * t + a1) * t
    return s * (1.0 - poly * jnp.exp(-ax * ax))


def _gelu(x):
    # PyTorch nn.GELU() default ("exact" erf formulation).
    return 0.5 * x * (1.0 + _erf(x * SQRT1_2))


# ---------------------------------------------------------------------------
# Kernel A (fused): for every input sequence
#   y   = LayerNorm( x + Mlp_fc1(mean_tokens(x)) )
#   cmb = y[1:] + 2 * y[0]
# then (shot-group mean over the batch axis when shot > 1), L2-normalize over
# channels and subtract the channel mean.  Everything happens in ONE grid step
# with all sequences resident in VMEM (batch sizes here are tiny), so no
# intermediate ever goes back to HBM.
# ---------------------------------------------------------------------------
def _prep_kernel(x_ref, w1_ref, b1_ref, w2_ref, b2_ref, g_ref, beta_ref, o_ref,
                 *, shot):
    SW, n, c = x_ref.shape
    ways = SW // shot

    combs = []
    for b in range(SW):                                    # static unroll (SW small)
        x = x_ref[b]                                       # (n, c)
        mean_tok = jnp.mean(x, axis=0, keepdims=True)      # (1, c)
        h = jnp.dot(mean_tok, w1_ref[...],
                    preferred_element_type=jnp.float32) + b1_ref[...]
        h = _gelu(h)                                       # Dropout = identity (eval)
        res = jnp.dot(h, w2_ref[...],
                      preferred_element_type=jnp.float32) + b2_ref[...]
        y = x + res                                        # residual broadcast over tokens
        mu = jnp.mean(y, axis=-1, keepdims=True)
        var = jnp.mean((y - mu) ** 2, axis=-1, keepdims=True)
        yn = (y - mu) * lax.rsqrt(var + 1e-5) * g_ref[...] + beta_ref[...]
        combs.append(yn[1:, :] + 2.0 * yn[0:1, :])         # (n-1, c)

    inv_shot = 1.0 / float(shot)
    for w in range(ways):                                  # static unroll (ways small)
        fs = combs[w]
        for s in range(1, shot):                           # shot-group mean (identity if shot==1)
            fs = fs + combs[s * ways + w]
        fs = fs * inv_shot
        nrm = jnp.sqrt(jnp.sum(fs * fs, axis=-1, keepdims=True))
        fsn = fs / jnp.maximum(nrm, 1e-12)                 # F.normalize(p=2, dim=-1)
        o_ref[w] = fsn - jnp.mean(fsn, axis=-1, keepdims=True)


def prep_combine_normalize(x, params, shot):
    SW, n, c = x.shape
    hid = params["fc1_w1"].shape[1]
    ways = SW // shot
    kernel = functools.partial(_prep_kernel, shot=shot)
    return pl.pallas_call(
        kernel,
        out_shape=jax.ShapeDtypeStruct((ways, n - 1, c), jnp.float32),
        grid=(1,),
        in_specs=[
            pl.BlockSpec((SW, n, c), lambda i: (0, 0, 0)),
            pl.BlockSpec((c, hid), lambda i: (0, 0)),
            pl.BlockSpec((1, hid), lambda i: (0, 0)),
            pl.BlockSpec((hid, c), lambda i: (0, 0)),
            pl.BlockSpec((1, c), lambda i: (0, 0)),
            pl.BlockSpec((1, c), lambda i: (0, 0)),
            pl.BlockSpec((1, c), lambda i: (0, 0)),
        ],
        out_specs=pl.BlockSpec((ways, n - 1, c), lambda i: (0, 0, 0)),
        compiler_params=pltpu.CompilerParams(dimension_semantics=("parallel",)),
    )(x, params["fc1_w1"], params["fc1_b1"].reshape(1, -1),
      params["fc1_w2"], params["fc1_b2"].reshape(1, -1),
      params["ln_g"].reshape(1, -1), params["ln_b"].reshape(1, -1))


# ---------------------------------------------------------------------------
# Kernel B (fused scoring): single grid step, all queries handled with the
# shot features + fc2 weights resident in VMEM.  Per query:
#   scores = (shot @ query^T)^2  -> flatten(1) -> fc2 Mlp -> lane-reduce head
# The per-query dot_generals run back-to-back on the MXU against the resident
# shot block (total MXU work identical to one (W*m, c) x (c, Q*m) product);
# keeping the flatten per query avoids any cross-lane transpose of the big
# similarity matrix.  Output is stored lane-dense as (Q, ways, 128).
# ---------------------------------------------------------------------------
def _score_kernel(fq_ref, fs_ref, w1_ref, b1_ref, w2_ref, b2_ref, o_ref):
    Wn, m, c = fs_ref.shape
    Q = fq_ref.shape[0]
    fs_flat = fs_ref[...].reshape(Wn * m, c)               # (W*m, c), loaded once
    w1 = w1_ref[...]
    b1 = b1_ref[...]
    w2row = w2_ref[...]                                    # (1, hid)
    b2 = b2_ref[0]                                         # scalar from SMEM

    for q in range(Q):                                     # static unroll; weights stay resident
        # contract channel axes directly (no explicit transpose of the query block)
        s = lax.dot_general(fs_flat, fq_ref[q],
                            dimension_numbers=(((1,), (1,)), ((), ())),
                            preferred_element_type=jnp.float32)      # (W*m, m)
        flat = (s * s).reshape(Wn, m * m)                  # row-major == torch .flatten(1)
        hdn = _gelu(jnp.dot(flat, w1,
                            preferred_element_type=jnp.float32) + b1)  # (W, hid)
        # out_features == 1 head: lane-reduce on VPU/XLU instead of a 1-column MXU matmul
        sc = jnp.sum(hdn * w2row, axis=-1, keepdims=True) + b2          # (W, 1)
        o_ref[q] = jnp.broadcast_to(sc, (Wn, 128))         # lane-dense (full 128-lane) store


def score(feat_query, feat_shot, w1, b1, w2, b2):
    Q, m, c = feat_query.shape
    Wn = feat_shot.shape[0]
    hid = w1.shape[1]
    out = pl.pallas_call(
        _score_kernel,
        out_shape=jax.ShapeDtypeStruct((Q, Wn, 128), jnp.float32),
        grid=(1,),
        in_specs=[
            pl.BlockSpec((Q, m, c), lambda i: (0, 0, 0)),
            pl.BlockSpec((Wn, m, c), lambda i: (0, 0, 0)),
            pl.BlockSpec((m * m, hid), lambda i: (0, 0)),
            pl.BlockSpec((1, hid), lambda i: (0, 0)),
            pl.BlockSpec((1, hid), lambda i: (0, 0)),
            pl.BlockSpec(memory_space=pltpu.MemorySpace.SMEM),   # scalar fc2 bias
        ],
        out_specs=pl.BlockSpec((Q, Wn, 128), lambda i: (0, 0, 0)),
        compiler_params=pltpu.CompilerParams(dimension_semantics=("parallel",)),
    )(feat_query, feat_shot, w1, b1.reshape(1, -1), w2.reshape(1, -1),
      b2.reshape(-1))
    return out[:, :, 0]                                    # (Q, Wn); strip lane padding


# ---------------------------------------------------------------------------
# Full CPEA_AMMD forward (3 fused pallas_calls + trivial wrapper slicing)
# ---------------------------------------------------------------------------
def cpea_ammd_forward(feat_query, feat_shot, params, shot):
    fq = prep_combine_normalize(feat_query, params, shot=1)     # (Q, n-1, c)
    fs = prep_combine_normalize(feat_shot, params, shot=shot)   # (ways, n-1, c)
    scores = score(fq, fs, params["fc2_w1"], params["fc2_b1"],
                   params["fc2_w2"], params["fc2_b2"])          # (Q, ways)
    results = [scores[i:i + 1] for i in range(scores.shape[0])]  # list of (1, ways)
    return results, None


# ---------------------------------------------------------------------------
# Pure-JAX reference (same math) for a correctness check
# ---------------------------------------------------------------------------
def _mlp_ref(x, w1, b1, w2, b2):
    return jnp.dot(_gelu(jnp.dot(x, w1) + b1), w2) + b2


def forward_reference(feat_query, feat_shot, params, shot):
    def pre(x):
        res = _mlp_ref(jnp.mean(x, axis=1, keepdims=True),
                       params["fc1_w1"], params["fc1_b1"],
                       params["fc1_w2"], params["fc1_b2"])
        y = x + res
        mu = jnp.mean(y, axis=-1, keepdims=True)
        var = jnp.mean((y - mu) ** 2, axis=-1, keepdims=True)
        yn = (y - mu) / jnp.sqrt(var + 1e-5) * params["ln_g"] + params["ln_b"]
        return yn[:, 1:, :] + 2.0 * yn[:, 0:1, :]

    def norm_center(x):
        nrm = jnp.sqrt(jnp.sum(x * x, axis=-1, keepdims=True))
        xn = x / jnp.maximum(nrm, 1e-12)
        return xn - jnp.mean(xn, axis=-1, keepdims=True)

    fq = norm_center(pre(feat_query))
    fs = pre(feat_shot)
    _, m, c = fq.shape
    fs = fs.reshape(shot, -1, m, c).mean(axis=0)
    fs = norm_center(fs)

    results = []
    for i in range(fq.shape[0]):
        out = jnp.einsum("wmc,nc->wmn", fs, fq[i])
        out = (out ** 2).reshape(fs.shape[0], -1)
        out = _mlp_ref(out, params["fc2_w1"], params["fc2_b1"],
                       params["fc2_w2"], params["fc2_b2"])
        results.append(out.T)                              # (1, ways)
    return results, None


if __name__ == "__main__":
    # Small, module-consistent shapes:
    #   in_dim c = 32, tokens n = 17 (1 class + 16 image tokens, (n-1)^2 = 256
    #   plays the role of the 196^2 input of fc2), queries = 4, shot = 2, ways = 2.
    c, n = 32, 17
    m = n - 1
    Bq, shot, ways = 4, 2, 2
    hid1 = c // 4          # fc1 hidden = in_dim / 4
    hid2 = 256             # fc2 hidden

    key = jax.random.PRNGKey(0)
    ks = jax.random.split(key, 12)

    params = {
        "fc1_w1": (0.05 * jax.random.normal(ks[0], (c, hid1))).astype(jnp.float32),
        "fc1_b1": (0.01 * jax.random.normal(ks[1], (hid1,))).astype(jnp.float32),
        "fc1_w2": (0.05 * jax.random.normal(ks[2], (hid1, c))).astype(jnp.float32),
        "fc1_b2": (0.01 * jax.random.normal(ks[3], (c,))).astype(jnp.float32),
        "ln_g": (1.0 + 0.05 * jax.random.normal(ks[4], (c,))).astype(jnp.float32),
        "ln_b": (0.02 * jax.random.normal(ks[5], (c,))).astype(jnp.float32),
        "fc2_w1": (0.05 * jax.random.normal(ks[6], (m * m, hid2))).astype(jnp.float32),
        "fc2_b1": (0.01 * jax.random.normal(ks[7], (hid2,))).astype(jnp.float32),
        "fc2_w2": (0.05 * jax.random.normal(ks[8], (hid2, 1))).astype(jnp.float32),
        "fc2_b2": (0.01 * jax.random.normal(ks[9], (1,))).astype(jnp.float32),
    }

    feat_query = jax.random.normal(ks[10], (Bq, n, c), dtype=jnp.float32)
    feat_shot = jax.random.normal(ks[11], (shot * ways, n, c), dtype=jnp.float32)

    results, aux = cpea_ammd_forward(feat_query, feat_shot, params, shot)
    results = jax.block_until_ready(results)

    ref_results, _ = forward_reference(feat_query, feat_shot, params, shot)
    for got, want in zip(results, ref_results):
        assert got.shape == (1, ways), got.shape
        if not jnp.allclose(got, want, rtol=1e-3, atol=1e-3):
            raise AssertionError("Pallas result mismatch vs JAX reference")

    print("KERNEL_OK")
</pallas_src>

<mosaic_0001>
module attributes {stable_mosaic.version = 11 : i64} {
  func.func @_prep_kernel(%arg0: i32, %arg1: memref<4x17x32xf32, #tpu.memory_space<vmem>>, %arg2: memref<32x8xf32, #tpu.memory_space<vmem>>, %arg3: memref<1x8xf32, #tpu.memory_space<vmem>>, %arg4: memref<8x32xf32, #tpu.memory_space<vmem>>, %arg5: memref<1x32xf32, #tpu.memory_space<vmem>>, %arg6: memref<1x32xf32, #tpu.memory_space<vmem>>, %arg7: memref<1x32xf32, #tpu.memory_space<vmem>>, %arg8: memref<4x16x32xf32, #tpu.memory_space<vmem>>) attributes {dimension_semantics = [#tpu.dimension_semantics<parallel>], iteration_bounds = array<i64: 1>, scalar_prefetch = 0 : i64, scratch_operands = 0 : i64, tpu.core_type = #tpu.core_type<tc>, window_params = [{pipeline_mode = #tpu.pipeline_mode<synchronous>, transform_indices = @transform_0, window_bounds = array<i64: 4, 17, 32>}, {pipeline_mode = #tpu.pipeline_mode<synchronous>, transform_indices = @transform_1, window_bounds = array<i64: 32, 8>}, {pipeline_mode = #tpu.pipeline_mode<synchronous>, transform_indices = @transform_2, window_bounds = array<i64: 1, 8>}, {pipeline_mode = #tpu.pipeline_mode<synchronous>, transform_indices = @transform_3, window_bounds = array<i64: 8, 32>}, {pipeline_mode = #tpu.pipeline_mode<synchronous>, transform_indices = @transform_4, window_bounds = array<i64: 1, 32>}, {pipeline_mode = #tpu.pipeline_mode<synchronous>, transform_indices = @transform_5, window_bounds = array<i64: 1, 32>}, {pipeline_mode = #tpu.pipeline_mode<synchronous>, transform_indices = @transform_6, window_bounds = array<i64: 1, 32>}, {pipeline_mode = #tpu.pipeline_mode<synchronous>, transform_indices = @transform_7, window_bounds = array<i64: 4, 16, 32>}]} {
    %c0 = arith.constant 0 : index
    %c0_0 = arith.constant 0 : index
    %c0_1 = arith.constant 0 : index
    %0 = vector.load %arg1[%c0, %c0_0, %c0_1] : memref<4x17x32xf32, #tpu.memory_space<vmem>>, vector<1x17x32xf32>
    %1 = vector.shape_cast %0 : vector<1x17x32xf32> to vector<17x32xf32>
    %cst = arith.constant dense<0.000000e+00> : vector<32xf32>
    %2 = vector.multi_reduction <add>, %1, %cst [0] : vector<17x32xf32> to vector<32xf32>
    %3 = vector.shape_cast %2 : vector<32xf32> to vector<1x32xf32>
    %cst_2 = arith.constant 1.700000e+01 : f32
    %4 = vector.broadcast %cst_2 : f32 to vector<1x32xf32>
    %5 = arith.divf %3, %4 : vector<1x32xf32>
    %c0_3 = arith.constant 0 : index
    %c0_4 = arith.constant 0 : index
    %6 = vector.load %arg2[%c0_3, %c0_4] : memref<32x8xf32, #tpu.memory_space<vmem>>, vector<32x8xf32>
    %cst_5 = arith.constant dense<0.000000e+00> : vector<1x8xf32>
    %7 = tpu.matmul %5, %6, %cst_5 {dimension_numbers = #tpu.dot_dimension_numbers<[1], [0], [0], [1], [0, 0, 1, 1], [], []>} : vector<1x32xf32>, vector<32x8xf32>, vector<1x8xf32> -> vector<1x8xf32>
    %c0_6 = arith.constant 0 : index
    %c0_7 = arith.constant 0 : index
    %8 = vector.load %arg3[%c0_6, %c0_7] : memref<1x8xf32, #tpu.memory_space<vmem>>, vector<1x8xf32>
    %9 = arith.addf %7, %8 : vector<1x8xf32>
    %cst_8 = arith.constant 5.000000e-01 : f32
    %10 = vector.broadcast %cst_8 : f32 to vector<1x8xf32>
    %11 = arith.mulf %10, %9 : vector<1x8xf32>
    %cst_9 = arith.constant 0.707106769 : f32
    %12 = vector.broadcast %cst_9 : f32 to vector<1x8xf32>
    %13 = arith.mulf %9, %12 : vector<1x8xf32>
    %cst_10 = arith.constant 0.000000e+00 : f32
    %14 = vector.broadcast %cst_10 : f32 to vector<1x8xf32>
    %15 = arith.cmpf oge, %13, %14 : vector<1x8xf32>
    %cst_11 = arith.constant 1.000000e+00 : f32
    %cst_12 = arith.constant -1.000000e+00 : f32
    %16 = vector.broadcast %cst_11 : f32 to vector<1x8xf32>
    %17 = vector.broadcast %cst_12 : f32 to vector<1x8xf32>
    %18 = arith.select %15, %16, %17 : vector<1x8xi1>, vector<1x8xf32>
    %19 = math.absf %13 : vector<1x8xf32>
    %cst_13 = arith.constant 0.327591091 : f32
    %20 = vector.broadcast %cst_13 : f32 to vector<1x8xf32>
    %21 = arith.mulf %20, %19 : vector<1x8xf32>
    %cst_14 = arith.constant 1.000000e+00 : f32
    %22 = vector.broadcast %cst_14 : f32 to vector<1x8xf32>
    %23 = arith.addf %22, %21 : vector<1x8xf32>
    %cst_15 = arith.constant 1.000000e+00 : f32
    %24 = vector.broadcast %cst_15 : f32 to vector<1x8xf32>
    %25 = arith.divf %24, %23 : vector<1x8xf32>
    %cst_16 = arith.constant 1.06140542 : f32
    %26 = vector.broadcast %cst_16 : f32 to vector<1x8xf32>
    %27 = arith.mulf %26, %25 : vector<1x8xf32>
    %cst_17 = arith.constant -1.45315206 : f32
    %28 = vector.broadcast %cst_17 : f32 to vector<1x8xf32>
    %29 = arith.addf %27, %28 : vector<1x8xf32>
    %30 = arith.mulf %29, %25 : vector<1x8xf32>
    %cst_18 = arith.constant 1.42141378 : f32
    %31 = vector.broadcast %cst_18 : f32 to vector<1x8xf32>
    %32 = arith.addf %30, %31 : vector<1x8xf32>
    %33 = arith.mulf %32, %25 : vector<1x8xf32>
    %cst_19 = arith.constant -0.284496725 : f32
    %34 = vector.broadcast %cst_19 : f32 to vector<1x8xf32>
    %35 = arith.addf %33, %34 : vector<1x8xf32>
    %36 = arith.mulf %35, %25 : vector<1x8xf32>
    %cst_20 = arith.constant 0.254829586 : f32
    %37 = vector.broadcast %cst_20 : f32 to vector<1x8xf32>
    %38 = arith.addf %36, %37 : vector<1x8xf32>
    %39 = arith.mulf %38, %25 : vector<1x8xf32>
    %cst_21 = arith.constant 0.000000e+00 : f32
    %40 = vector.broadcast %cst_21 : f32 to vector<1x8xf32>
    %41 = arith.subf %40, %19 : vector<1x8xf32>
    %42 = arith.mulf %41, %19 : vector<1x8xf32>
    %43 = math.exp %42 : vector<1x8xf32>
    %44 = arith.mulf %39, %43 : vector<1x8xf32>
    %cst_22 = arith.constant 1.000000e+00 : f32
    %45 = vector.broadcast %cst_22 : f32 to vector<1x8xf32>
    %46 = arith.subf %45, %44 : vector<1x8xf32>
    %47 = arith.mulf %18, %46 : vector<1x8xf32>
    %cst_23 = arith.constant 1.000000e+00 : f32
    %48 = vector.broadcast %cst_23 : f32 to vector<1x8xf32>
    %49 = arith.addf %48, %47 : vector<1x8xf32>
    %50 = arith.mulf %11, %49 : vector<1x8xf32>
    %c0_24 = arith.constant 0 : index
    %c0_25 = arith.constant 0 : index
    %51 = vector.load %arg4[%c0_24, %c0_25] : memref<8x32xf32, #tpu.memory_space<vmem>>, vector<8x32xf32>
    %cst_26 = arith.constant dense<0.000000e+00> : vector<1x32xf32>
    %52 = tpu.matmul %50, %51, %cst_26 {dimension_numbers = #tpu.dot_dimension_numbers<[1], [0], [0], [1], [0, 0, 1, 1], [], []>} : vector<1x8xf32>, vector<8x32xf32>, vector<1x32xf32> -> vector<1x32xf32>
    %c0_27 = arith.constant 0 : index
    %c0_28 = arith.constant 0 : index
    %53 = vector.load %arg5[%c0_27, %c0_28] : memref<1x32xf32, #tpu.memory_space<vmem>>, vector<1x32xf32>
    %54 = arith.addf %52, %53 : vector<1x32xf32>
    %55 = vector.broadcast %54 : vector<1x32xf32> to vector<17x32xf32>
    %56 = arith.addf %1, %55 : vector<17x32xf32>
    %cst_29 = arith.constant dense<0.000000e+00> : vector<17xf32>
    %57 = vector.multi_reduction <add>, %56, %cst_29 [1] : vector<17x32xf32> to vector<17xf32>
    %58 = vector.shape_cast %57 : vector<17xf32> to vector<17x1xf32>
    %cst_30 = arith.constant 3.200000e+01 : f32
    %59 = vector.broadcast %cst_30 : f32 to vector<17x1xf32>
    %60 = arith.divf %58, %59 : vector<17x1xf32>
    %61 = vector.broadcast %60 : vector<17x1xf32> to vector<17x32xf32>
    %62 = arith.subf %56, %61 : vector<17x32xf32>
    %63 = arith.mulf %62, %62 : vector<17x32xf32>
    %cst_31 = arith.constant dense<0.000000e+00> : vector<17xf32>
    %64 = vector.multi_reduction <add>, %63, %cst_31 [1] : vector<17x32xf32> to vector<17xf32>
    %65 = vector.shape_cast %64 : vector<17xf32> to vector<17x1xf32>
    %cst_32 = arith.constant 3.200000e+01 : f32
    %66 = vector.broadcast %cst_32 : f32 to vector<17x1xf32>
    %67 = arith.divf %65, %66 : vector<17x1xf32>
    %68 = vector.broadcast %60 : vector<17x1xf32> to vector<17x32xf32>
    %69 = arith.subf %56, %68 : vector<17x32xf32>
    %cst_33 = arith.constant 9.99999974E-6 : f32
    %70 = vector.broadcast %cst_33 : f32 to vector<17x1xf32>
    %71 = arith.addf %67, %70 : vector<17x1xf32>
    %72 = math.rsqrt %71 : vector<17x1xf32>
    %73 = vector.broadcast %72 : vector<17x1xf32> to vector<17x32xf32>
    %74 = arith.mulf %69, %73 : vector<17x32xf32>
    %c0_34 = arith.constant 0 : index
    %c0_35 = arith.constant 0 : index
    %75 = vector.load %arg6[%c0_34, %c0_35] : memref<1x32xf32, #tpu.memory_space<vmem>>, vector<1x32xf32>
    %76 = vector.broadcast %75 : vector<1x32xf32> to vector<17x32xf32>
    %77 = arith.mulf %74, %76 : vector<17x32xf32>
    %c0_36 = arith.constant 0 : index
    %c0_37 = arith.constant 0 : index
    %78 = vector.load %arg7[%c0_36, %c0_37] : memref<1x32xf32, #tpu.memory_space<vmem>>, vector<1x32xf32>
    %79 = vector.broadcast %78 : vector<1x32xf32> to vector<17x32xf32>
    %80 = arith.addf %77, %79 : vector<17x32xf32>
    %81 = vector.extract_strided_slice %80 {offsets = [1, 0], sizes = [16, 32], strides = [1, 1]} : vector<17x32xf32> to vector<16x32xf32>
    %82 = vector.extract_strided_slice %80 {offsets = [0, 0], sizes = [1, 32], strides = [1, 1]} : vector<17x32xf32> to vector<1x32xf32>
    %cst_38 = arith.constant 2.000000e+00 : f32
    %83 = vector.broadcast %cst_38 : f32 to vector<1x32xf32>
    %84 = arith.mulf %83, %82 : vector<1x32xf32>
    %85 = vector.broadcast %84 : vector<1x32xf32> to vector<16x32xf32>
    %86 = arith.addf %81, %85 : vector<16x32xf32>
    %c1 = arith.constant 1 : index
    %c0_39 = arith.constant 0 : index
    %c0_40 = arith.constant 0 : index
    %87 = vector.load %arg1[%c1, %c0_39, %c0_40] : memref<4x17x32xf32, #tpu.memory_space<vmem>>, vector<1x17x32xf32>
    %88 = vector.shape_cast %87 : vector<1x17x32xf32> to vector<17x32xf32>
    %cst_41 = arith.constant dense<0.000000e+00> : vector<32xf32>
    %89 = vector.multi_reduction <add>, %88, %cst_41 [0] : vector<17x32xf32> to vector<32xf32>
    %90 = vector.shape_cast %89 : vector<32xf32> to vector<1x32xf32>
    %cst_42 = arith.constant 1.700000e+01 : f32
    %91 = vector.broadcast %cst_42 : f32 to vector<1x32xf32>
    %92 = arith.divf %90, %91 : vector<1x32xf32>
    %c0_43 = arith.constant 0 : index
    %c0_44 = arith.constant 0 : index
    %93 = vector.load %arg2[%c0_43, %c0_44] : memref<32x8xf32, #tpu.memory_space<vmem>>, vector<32x8xf32>
    %cst_45 = arith.constant dense<0.000000e+00> : vector<1x8xf32>
    %94 = tpu.matmul %92, %93, %cst_45 {dimension_numbers = #tpu.dot_dimension_numbers<[1], [0], [0], [1], [0, 0, 1, 1], [], []>} : vector<1x32xf32>, vector<32x8xf32>, vector<1x8xf32> -> vector<1x8xf32>
    %c0_46 = arith.constant 0 : index
    %c0_47 = arith.constant 0 : index
    %95 = vector.load %arg3[%c0_46, %c0_47] : memref<1x8xf32, #tpu.memory_space<vmem>>, vector<1x8xf32>
    %96 = arith.addf %94, %95 : vector<1x8xf32>
    %cst_48 = arith.constant 5.000000e-01 : f32
    %97 = vector.broadcast %cst_48 : f32 to vector<1x8xf32>
    %98 = arith.mulf %97, %96 : vector<1x8xf32>
    %cst_49 = arith.constant 0.707106769 : f32
    %99 = vector.broadcast %cst_49 : f32 to vector<1x8xf32>
    %100 = arith.mulf %96, %99 : vector<1x8xf32>
    %cst_50 = arith.constant 0.000000e+00 : f32
    %101 = vector.broadcast %cst_50 : f32 to vector<1x8xf32>
    %102 = arith.cmpf oge, %100, %101 : vector<1x8xf32>
    %cst_51 = arith.constant 1.000000e+00 : f32
    %cst_52 = arith.constant -1.000000e+00 : f32
    %103 = vector.broadcast %cst_51 : f32 to vector<1x8xf32>
    %104 = vector.broadcast %cst_52 : f32 to vector<1x8xf32>
    %105 = arith.select %102, %103, %104 : vector<1x8xi1>, vector<1x8xf32>
    %106 = math.absf %100 : vector<1x8xf32>
    %cst_53 = arith.constant 0.327591091 : f32
    %107 = vector.broadcast %cst_53 : f32 to vector<1x8xf32>
    %108 = arith.mulf %107, %106 : vector<1x8xf32>
    %cst_54 = arith.constant 1.000000e+00 : f32
    %109 = vector.broadcast %cst_54 : f32 to vector<1x8xf32>
    %110 = arith.addf %109, %108 : vector<1x8xf32>
    %cst_55 = arith.constant 1.000000e+00 : f32
    %111 = vector.broadcast %cst_55 : f32 to vector<1x8xf32>
    %112 = arith.divf %111, %110 : vector<1x8xf32>
    %cst_56 = arith.constant 1.06140542 : f32
    %113 = vector.broadcast %cst_56 : f32 to vector<1x8xf32>
    %114 = arith.mulf %113, %112 : vector<1x8xf32>
    %cst_57 = arith.constant -1.45315206 : f32
    %115 = vector.broadcast %cst_57 : f32 to vector<1x8xf32>
    %116 = arith.addf %114, %115 : vector<1x8xf32>
    %117 = arith.mulf %116, %112 : vector<1x8xf32>
    %cst_58 = arith.constant 1.42141378 : f32
    %118 = vector.broadcast %cst_58 : f32 to vector<1x8xf32>
    %119 = arith.addf %117, %118 : vector<1x8xf32>
    %120 = arith.mulf %119, %112 : vector<1x8xf32>
    %cst_59 = arith.constant -0.284496725 : f32
    %121 = vector.broadcast %cst_59 : f32 to vector<1x8xf32>
    %122 = arith.addf %120, %121 : vector<1x8xf32>
    %123 = arith.mulf %122, %112 : vector<1x8xf32>
    %cst_60 = arith.constant 0.254829586 : f32
    %124 = vector.broadcast %cst_60 : f32 to vector<1x8xf32>
    %125 = arith.addf %123, %124 : vector<1x8xf32>
    %126 = arith.mulf %125, %112 : vector<1x8xf32>
    %cst_61 = arith.constant 0.000000e+00 : f32
    %127 = vector.broadcast %cst_61 : f32 to vector<1x8xf32>
    %128 = arith.subf %127, %106 : vector<1x8xf32>
    %129 = arith.mulf %128, %106 : vector<1x8xf32>
    %130 = math.exp %129 : vector<1x8xf32>
    %131 = arith.mulf %126, %130 : vector<1x8xf32>
    %cst_62 = arith.constant 1.000000e+00 : f32
    %132 = vector.broadcast %cst_62 : f32 to vector<1x8xf32>
    %133 = arith.subf %132, %131 : vector<1x8xf32>
    %134 = arith.mulf %105, %133 : vector<1x8xf32>
    %cst_63 = arith.constant 1.000000e+00 : f32
    %135 = vector.broadcast %cst_63 : f32 to vector<1x8xf32>
    %136 = arith.addf %135, %134 : vector<1x8xf32>
    %137 = arith.mulf %98, %136 : vector<1x8xf32>
    %c0_64 = arith.constant 0 : index
    %c0_65 = arith.constant 0 : index
    %138 = vector.load %arg4[%c0_64, %c0_65] : memref<8x32xf32, #tpu.memory_space<vmem>>, vector<8x32xf32>
    %cst_66 = arith.constant dense<0.000000e+00> : vector<1x32xf32>
    %139 = tpu.matmul %137, %138, %cst_66 {dimension_numbers = #tpu.dot_dimension_numbers<[1], [0], [0], [1], [0, 0, 1, 1], [], []>} : vector<1x8xf32>, vector<8x32xf32>, vector<1x32xf32> -> vector<1x32xf32>
    %c0_67 = arith.constant 0 : index
    %c0_68 = arith.constant 0 : index
    %140 = vector.load %arg5[%c0_67, %c0_68] : memref<1x32xf32, #tpu.memory_space<vmem>>, vector<1x32xf32>
    %141 = arith.addf %139, %140 : vector<1x32xf32>
    %142 = vector.broadcast %141 : vector<1x32xf32> to vector<17x32xf32>
    %143 = arith.addf %88, %142 : vector<17x32xf32>
    %cst_69 = arith.constant dense<0.000000e+00> : vector<17xf32>
    %144 = vector.multi_reduction <add>, %143, %cst_69 [1] : vector<17x32xf32> to vector<17xf32>
    %145 = vector.shape_cast %144 : vector<17xf32> to vector<17x1xf32>
    %cst_70 = arith.constant 3.200000e+01 : f32
    %146 = vector.broadcast %cst_70 : f32 to vector<17x1xf32>
    %147 = arith.divf %145, %146 : vector<17x1xf32>
    %148 = vector.broadcast %147 : vector<17x1xf32> to vector<17x32xf32>
    %149 = arith.subf %143, %148 : vector<17x32xf32>
    %150 = arith.mulf %149, %149 : vector<17x32xf32>
    %cst_71 = arith.constant dense<0.000000e+00> : vector<17xf32>
    %151 = vector.multi_reduction <add>, %150, %cst_71 [1] : vector<17x32xf32> to vector<17xf32>
    %152 = vector.shape_cast %151 : vector<17xf32> to vector<17x1xf32>
    %cst_72 = arith.constant 3.200000e+01 : f32
    %153 = vector.broadcast %cst_72 : f32 to vector<17x1xf32>
    %154 = arith.divf %152, %153 : vector<17x1xf32>
    %155 = vector.broadcast %147 : vector<17x1xf32> to vector<17x32xf32>
    %156 = arith.subf %143, %155 : vector<17x32xf32>
    %cst_73 = arith.constant 9.99999974E-6 : f32
    %157 = vector.broadcast %cst_73 : f32 to vector<17x1xf32>
    %158 = arith.addf %154, %157 : vector<17x1xf32>
    %159 = math.rsqrt %158 : vector<17x1xf32>
    %160 = vector.broadcast %159 : vector<17x1xf32> to vector<17x32xf32>
    %161 = arith.mulf %156, %160 : vector<17x32xf32>
    %c0_74 = arith.constant 0 : index
    %c0_75 = arith.constant 0 : index
    %162 = vector.load %arg6[%c0_74, %c0_75] : memref<1x32xf32, #tpu.memory_space<vmem>>, vector<1x32xf32>
    %163 = vector.broadcast %162 : vector<1x32xf32> to vector<17x32xf32>
    %164 = arith.mulf %161, %163 : vector<17x32xf32>
    %c0_76 = arith.constant 0 : index
    %c0_77 = arith.constant 0 : index
    %165 = vector.load %arg7[%c0_76, %c0_77] : memref<1x32xf32, #tpu.memory_space<vmem>>, vector<1x32xf32>
    %166 = vector.broadcast %165 : vector<1x32xf32> to vector<17x32xf32>
    %167 = arith.addf %164, %166 : vector<17x32xf32>
    %168 = vector.extract_strided_slice %167 {offsets = [1, 0], sizes = [16, 32], strides = [1, 1]} : vector<17x32xf32> to vector<16x32xf32>
    %169 = vector.extract_strided_slice %167 {offsets = [0, 0], sizes = [1, 32], strides = [1, 1]} : vector<17x32xf32> to vector<1x32xf32>
    %cst_78 = arith.constant 2.000000e+00 : f32
    %170 = vector.broadcast %cst_78 : f32 to vector<1x32xf32>
    %171 = arith.mulf %170, %169 : vector<1x32xf32>
    %172 = vector.broadcast %171 : vector<1x32xf32> to vector<16x32xf32>
    %173 = arith.addf %168, %172 : vector<16x32xf32>
    %c2 = arith.constant 2 : index
    %c0_79 = arith.constant 0 : index
    %c0_80 = arith.constant 0 : index
    %174 = vector.load %arg1[%c2, %c0_79, %c0_80] : memref<4x17x32xf32, #tpu.memory_space<vmem>>, vector<1x17x32xf32>
    %175 = vector.shape_cast %174 : vector<1x17x32xf32> to vector<17x32xf32>
    %cst_81 = arith.constant dense<0.000000e+00> : vector<32xf32>
    %176 = vector.multi_reduction <add>, %175, %cst_81 [0] : vector<17x32xf32> to vector<32xf32>
    %177 = vector.shape_cast %176 : vector<32xf32> to vector<1x32xf32>
    %cst_82 = arith.constant 1.700000e+01 : f32
    %178 = vector.broadcast %cst_82 : f32 to vector<1x32xf32>
    %179 = arith.divf %177, %178 : vector<1x32xf32>
    %c0_83 = arith.constant 0 : index
    %c0_84 = arith.constant 0 : index
    %180 = vector.load %arg2[%c0_83, %c0_84] : memref<32x8xf32, #tpu.memory_space<vmem>>, vector<32x8xf32>
    %cst_85 = arith.constant dense<0.000000e+00> : vector<1x8xf32>
    %181 = tpu.matmul %179, %180, %cst_85 {dimension_numbers = #tpu.dot_dimension_numbers<[1], [0], [0], [1], [0, 0, 1, 1], [], []>} : vector<1x32xf32>, vector<32x8xf32>, vector<1x8xf32> -> vector<1x8xf32>
    %c0_86 = arith.constant 0 : index
    %c0_87 = arith.constant 0 : index
    %182 = vector.load %arg3[%c0_86, %c0_87] : memref<1x8xf32, #tpu.memory_space<vmem>>, vector<1x8xf32>
    %183 = arith.addf %181, %182 : vector<1x8xf32>
    %cst_88 = arith.constant 5.000000e-01 : f32
    %184 = vector.broadcast %cst_88 : f32 to vector<1x8xf32>
    %185 = arith.mulf %184, %183 : vector<1x8xf32>
    %cst_89 = arith.constant 0.707106769 : f32
    %186 = vector.broadcast %cst_89 : f32 to vector<1x8xf32>
    %187 = arith.mulf %183, %186 : vector<1x8xf32>
    %cst_90 = arith.constant 0.000000e+00 : f32
    %188 = vector.broadcast %cst_90 : f32 to vector<1x8xf32>
    %189 = arith.cmpf oge, %187, %188 : vector<1x8xf32>
    %cst_91 = arith.constant 1.000000e+00 : f32
    %cst_92 = arith.constant -1.000000e+00 : f32
    %190 = vector.broadcast %cst_91 : f32 to vector<1x8xf32>
    %191 = vector.broadcast %cst_92 : f32 to vector<1x8xf32>
    %192 = arith.select %189, %190, %191 : vector<1x8xi1>, vector<1x8xf32>
    %193 = math.absf %187 : vector<1x8xf32>
    %cst_93 = arith.constant 0.327591091 : f32
    %194 = vector.broadcast %cst_93 : f32 to vector<1x8xf32>
    %195 = arith.mulf %194, %193 : vector<1x8xf32>
    %cst_94 = arith.constant 1.000000e+00 : f32
    %196 = vector.broadcast %cst_94 : f32 to vector<1x8xf32>
    %197 = arith.addf %196, %195 : vector<1x8xf32>
    %cst_95 = arith.constant 1.000000e+00 : f32
    %198 = vector.broadcast %cst_95 : f32 to vector<1x8xf32>
    %199 = arith.divf %198, %197 : vector<1x8xf32>
    %cst_96 = arith.constant 1.06140542 : f32
    %200 = vector.broadcast %cst_96 : f32 to vector<1x8xf32>
    %201 = arith.mulf %200, %199 : vector<1x8xf32>
    %cst_97 = arith.constant -1.45315206 : f32
    %202 = vector.broadcast %cst_97 : f32 to vector<1x8xf32>
    %203 = arith.addf %201, %202 : vector<1x8xf32>
    %204 = arith.mulf %203, %199 : vector<1x8xf32>
    %cst_98 = arith.constant 1.42141378 : f32
    %205 = vector.broadcast %cst_98 : f32 to vector<1x8xf32>
    %206 = arith.addf %204, %205 : vector<1x8xf32>
    %207 = arith.mulf %206, %199 : vector<1x8xf32>
    %cst_99 = arith.constant -0.284496725 : f32
    %208 = vector.broadcast %cst_99 : f32 to vector<1x8xf32>
    %209 = arith.addf %207, %208 : vector<1x8xf32>
    %210 = arith.mulf %209, %199 : vector<1x8xf32>
    %cst_100 = arith.constant 0.254829586 : f32
    %211 = vector.broadcast %cst_100 : f32 to vector<1x8xf32>
    %212 = arith.addf %210, %211 : vector<1x8xf32>
    %213 = arith.mulf %212, %199 : vector<1x8xf32>
    %cst_101 = arith.constant 0.000000e+00 : f32
    %214 = vector.broadcast %cst_101 : f32 to vector<1x8xf32>
    %215 = arith.subf %214, %193 : vector<1x8xf32>
    %216 = arith.mulf %215, %193 : vector<1x8xf32>
    %217 = math.exp %216 : vector<1x8xf32>
    %218 = arith.mulf %213, %217 : vector<1x8xf32>
    %cst_102 = arith.constant 1.000000e+00 : f32
    %219 = vector.broadcast %cst_102 : f32 to vector<1x8xf32>
    %220 = arith.subf %219, %218 : vector<1x8xf32>
    %221 = arith.mulf %192, %220 : vector<1x8xf32>
    %cst_103 = arith.constant 1.000000e+00 : f32
    %222 = vector.broadcast %cst_103 : f32 to vector<1x8xf32>
    %223 = arith.addf %222, %221 : vector<1x8xf32>
    %224 = arith.mulf %185, %223 : vector<1x8xf32>
    %c0_104 = arith.constant 0 : index
    %c0_105 = arith.constant 0 : index
    %225 = vector.load %arg4[%c0_104, %c0_105] : memref<8x32xf32, #tpu.memory_space<vmem>>, vector<8x32xf32>
    %cst_106 = arith.constant dense<0.000000e+00> : vector<1x32xf32>
    %226 = tpu.matmul %224, %225, %cst_106 {dimension_numbers = #tpu.dot_dimension_numbers<[1], [0], [0], [1], [0, 0, 1, 1], [], []>} : vector<1x8xf32>, vector<8x32xf32>, vector<1x32xf32> -> vector<1x32xf32>
    %c0_107 = arith.constant 0 : index
    %c0_108 = arith.constant 0 : index
    %227 = vector.load %arg5[%c0_107, %c0_108] : memref<1x32xf32, #tpu.memory_space<vmem>>, vector<1x32xf32>
    %228 = arith.addf %226, %227 : vector<1x32xf32>
    %229 = vector.broadcast %228 : vector<1x32xf32> to vector<17x32xf32>
    %230 = arith.addf %175, %229 : vector<17x32xf32>
    %cst_109 = arith.constant dense<0.000000e+00> : vector<17xf32>
    %231 = vector.multi_reduction <add>, %230, %cst_109 [1] : vector<17x32xf32> to vector<17xf32>
    %232 = vector.shape_cast %231 : vector<17xf32> to vector<17x1xf32>
    %cst_110 = arith.constant 3.200000e+01 : f32
    %233 = vector.broadcast %cst_110 : f32 to vector<17x1xf32>
    %234 = arith.divf %232, %233 : vector<17x1xf32>
    %235 = vector.broadcast %234 : vector<17x1xf32> to vector<17x32xf32>
    %236 = arith.subf %230, %235 : vector<17x32xf32>
    %237 = arith.mulf %236, %236 : vector<17x32xf32>
    %cst_111 = arith.constant dense<0.000000e+00> : vector<17xf32>
    %238 = vector.multi_reduction <add>, %237, %cst_111 [1] : vector<17x32xf32> to vector<17xf32>
    %239 = vector.shape_cast %238 : vector<17xf32> to vector<17x1xf32>
    %cst_112 = arith.constant 3.200000e+01 : f32
    %240 = vector.broadcast %cst_112 : f32 to vector<17x1xf32>
    %241 = arith.divf %239, %240 : vector<17x1xf32>
    %242 = vector.broadcast %234 : vector<17x1xf32> to vector<17x32xf32>
    %243 = arith.subf %230, %242 : vector<17x32xf32>
    %cst_113 = arith.constant 9.99999974E-6 : f32
    %244 = vector.broadcast %cst_113 : f32 to vector<17x1xf32>
    %245 = arith.addf %241, %244 : vector<17x1xf32>
    %246 = math.rsqrt %245 : vector<17x1xf32>
    %247 = vector.broadcast %246 : vector<17x1xf32> to vector<17x32xf32>
    %248 = arith.mulf %243, %247 : vector<17x32xf32>
    %c0_114 = arith.constant 0 : index
    %c0_115 = arith.constant 0 : index
    %249 = vector.load %arg6[%c0_114, %c0_115] : memref<1x32xf32, #tpu.memory_space<vmem>>, vector<1x32xf32>
    %250 = vector.broadcast %249 : vector<1x32xf32> to vector<17x32xf32>
    %251 = arith.mulf %248, %250 : vector<17x32xf32>
    %c0_116 = arith.constant 0 : index
    %c0_117 = arith.constant 0 : index
    %252 = vector.load %arg7[%c0_116, %c0_117] : memref<1x32xf32, #tpu.memory_space<vmem>>, vector<1x32xf32>
    %253 = vector.broadcast %252 : vector<1x32xf32> to vector<17x32xf32>
    %254 = arith.addf %251, %253 : vector<17x32xf32>
    %255 = vector.extract_strided_slice %254 {offsets = [1, 0], sizes = [16, 32], strides = [1, 1]} : vector<17x32xf32> to vector<16x32xf32>
    %256 = vector.extract_strided_slice %254 {offsets = [0, 0], sizes = [1, 32], strides = [1, 1]} : vector<17x32xf32> to vector<1x32xf32>
    %cst_118 = arith.constant 2.000000e+00 : f32
    %257 = vector.broadcast %cst_118 : f32 to vector<1x32xf32>
    %258 = arith.mulf %257, %256 : vector<1x32xf32>
    %259 = vector.broadcast %258 : vector<1x32xf32> to vector<16x32xf32>
    %260 = arith.addf %255, %259 : vector<16x32xf32>
    %c3 = arith.constant 3 : index
    %c0_119 = arith.constant 0 : index
    %c0_120 = arith.constant 0 : index
    %261 = vector.load %arg1[%c3, %c0_119, %c0_120] : memref<4x17x32xf32, #tpu.memory_space<vmem>>, vector<1x17x32xf32>
    %262 = vector.shape_cast %261 : vector<1x17x32xf32> to vector<17x32xf32>
    %cst_121 = arith.constant dense<0.000000e+00> : vector<32xf32>
    %263 = vector.multi_reduction <add>, %262, %cst_121 [0] : vector<17x32xf32> to vector<32xf32>
    %264 = vector.shape_cast %263 : vector<32xf32> to vector<1x32xf32>
    %cst_122 = arith.constant 1.700000e+01 : f32
    %265 = vector.broadcast %cst_122 : f32 to vector<1x32xf32>
    %266 = arith.divf %264, %265 : vector<1x32xf32>
    %c0_123 = arith.constant 0 : index
    %c0_124 = arith.constant 0 : index
    %267 = vector.load %arg2[%c0_123, %c0_124] : memref<32x8xf32, #tpu.memory_space<vmem>>, vector<32x8xf32>
    %cst_125 = arith.constant dense<0.000000e+00> : vector<1x8xf32>
    %268 = tpu.matmul %266, %267, %cst_125 {dimension_numbers = #tpu.dot_dimension_numbers<[1], [0], [0], [1], [0, 0, 1, 1], [], []>} : vector<1x32xf32>, vector<32x8xf32>, vector<1x8xf32> -> vector<1x8xf32>
    %c0_126 = arith.constant 0 : index
    %c0_127 = arith.constant 0 : index
    %269 = vector.load %arg3[%c0_126, %c0_127] : memref<1x8xf32, #tpu.memory_space<vmem>>, vector<1x8xf32>
    %270 = arith.addf %268, %269 : vector<1x8xf32>
    %cst_128 = arith.constant 5.000000e-01 : f32
    %271 = vector.broadcast %cst_128 : f32 to vector<1x8xf32>
    %272 = arith.mulf %271, %270 : vector<1x8xf32>
    %cst_129 = arith.constant 0.707106769 : f32
    %273 = vector.broadcast %cst_129 : f32 to vector<1x8xf32>
    %274 = arith.mulf %270, %273 : vector<1x8xf32>
    %cst_130 = arith.constant 0.000000e+00 : f32
    %275 = vector.broadcast %cst_130 : f32 to vector<1x8xf32>
    %276 = arith.cmpf oge, %274, %275 : vector<1x8xf32>
    %cst_131 = arith.constant 1.000000e+00 : f32
    %cst_132 = arith.constant -1.000000e+00 : f32
    %277 = vector.broadcast %cst_131 : f32 to vector<1x8xf32>
    %278 = vector.broadcast %cst_132 : f32 to vector<1x8xf32>
    %279 = arith.select %276, %277, %278 : vector<1x8xi1>, vector<1x8xf32>
    %280 = math.absf %274 : vector<1x8xf32>
    %cst_133 = arith.constant 0.327591091 : f32
    %281 = vector.broadcast %cst_133 : f32 to vector<1x8xf32>
    %282 = arith.mulf %281, %280 : vector<1x8xf32>
    %cst_134 = arith.constant 1.000000e+00 : f32
    %283 = vector.broadcast %cst_134 : f32 to vector<1x8xf32>
    %284 = arith.addf %283, %282 : vector<1x8xf32>
    %cst_135 = arith.constant 1.000000e+00 : f32
    %285 = vector.broadcast %cst_135 : f32 to vector<1x8xf32>
    %286 = arith.divf %285, %284 : vector<1x8xf32>
    %cst_136 = arith.constant 1.06140542 : f32
    %287 = vector.broadcast %cst_136 : f32 to vector<1x8xf32>
    %288 = arith.mulf %287, %286 : vector<1x8xf32>
    %cst_137 = arith.constant -1.45315206 : f32
    %289 = vector.broadcast %cst_137 : f32 to vector<1x8xf32>
    %290 = arith.addf %288, %289 : vector<1x8xf32>
    %291 = arith.mulf %290, %286 : vector<1x8xf32>
    %cst_138 = arith.constant 1.42141378 : f32
    %292 = vector.broadcast %cst_138 : f32 to vector<1x8xf32>
    %293 = arith.addf %291, %292 : vector<1x8xf32>
    %294 = arith.mulf %293, %286 : vector<1x8xf32>
    %cst_139 = arith.constant -0.284496725 : f32
    %295 = vector.broadcast %cst_139 : f32 to vector<1x8xf32>
    %296 = arith.addf %294, %295 : vector<1x8xf32>
    %297 = arith.mulf %296, %286 : vector<1x8xf32>
    %cst_140 = arith.constant 0.254829586 : f32
    %298 = vector.broadcast %cst_140 : f32 to vector<1x8xf32>
    %299 = arith.addf %297, %298 : vector<1x8xf32>
    %300 = arith.mulf %299, %286 : vector<1x8xf32>
    %cst_141 = arith.constant 0.000000e+00 : f32
    %301 = vector.broadcast %cst_141 : f32 to vector<1x8xf32>
    %302 = arith.subf %301, %280 : vector<1x8xf32>
    %303 = arith.mulf %302, %280 : vector<1x8xf32>
    %304 = math.exp %303 : vector<1x8xf32>
    %305 = arith.mulf %300, %304 : vector<1x8xf32>
    %cst_142 = arith.constant 1.000000e+00 : f32
    %306 = vector.broadcast %cst_142 : f32 to vector<1x8xf32>
    %307 = arith.subf %306, %305 : vector<1x8xf32>
    %308 = arith.mulf %279, %307 : vector<1x8xf32>
    %cst_143 = arith.constant 1.000000e+00 : f32
    %309 = vector.broadcast %cst_143 : f32 to vector<1x8xf32>
    %310 = arith.addf %309, %308 : vector<1x8xf32>
    %311 = arith.mulf %272, %310 : vector<1x8xf32>
    %c0_144 = arith.constant 0 : index
    %c0_145 = arith.constant 0 : index
    %312 = vector.load %arg4[%c0_144, %c0_145] : memref<8x32xf32, #tpu.memory_space<vmem>>, vector<8x32xf32>
    %cst_146 = arith.constant dense<0.000000e+00> : vector<1x32xf32>
    %313 = tpu.matmul %311, %312, %cst_146 {dimension_numbers = #tpu.dot_dimension_numbers<[1], [0], [0], [1], [0, 0, 1, 1], [], []>} : vector<1x8xf32>, vector<8x32xf32>, vector<1x32xf32> -> vector<1x32xf32>
    %c0_147 = arith.constant 0 : index
    %c0_148 = arith.constant 0 : index
    %314 = vector.load %arg5[%c0_147, %c0_148] : memref<1x32xf32, #tpu.memory_space<vmem>>, vector<1x32xf32>
    %315 = arith.addf %313, %314 : vector<1x32xf32>
    %316 = vector.broadcast %315 : vector<1x32xf32> to vector<17x32xf32>
    %317 = arith.addf %262, %316 : vector<17x32xf32>
    %cst_149 = arith.constant dense<0.000000e+00> : vector<17xf32>
    %318 = vector.multi_reduction <add>, %317, %cst_149 [1] : vector<17x32xf32> to vector<17xf32>
    %319 = vector.shape_cast %318 : vector<17xf32> to vector<17x1xf32>
    %cst_150 = arith.constant 3.200000e+01 : f32
    %320 = vector.broadcast %cst_150 : f32 to vector<17x1xf32>
    %321 = arith.divf %319, %320 : vector<17x1xf32>
    %322 = vector.broadcast %321 : vector<17x1xf32> to vector<17x32xf32>
    %323 = arith.subf %317, %322 : vector<17x32xf32>
    %324 = arith.mulf %323, %323 : vector<17x32xf32>
    %cst_151 = arith.constant dense<0.000000e+00> : vector<17xf32>
    %325 = vector.multi_reduction <add>, %324, %cst_151 [1] : vector<17x32xf32> to vector<17xf32>
    %326 = vector.shape_cast %325 : vector<17xf32> to vector<17x1xf32>
    %cst_152 = arith.constant 3.200000e+01 : f32
    %327 = vector.broadcast %cst_152 : f32 to vector<17x1xf32>
    %328 = arith.divf %326, %327 : vector<17x1xf32>
    %329 = vector.broadcast %321 : vector<17x1xf32> to vector<17x32xf32>
    %330 = arith.subf %317, %329 : vector<17x32xf32>
    %cst_153 = arith.constant 9.99999974E-6 : f32
    %331 = vector.broadcast %cst_153 : f32 to vector<17x1xf32>
    %332 = arith.addf %328, %331 : vector<17x1xf32>
    %333 = math.rsqrt %332 : vector<17x1xf32>
    %334 = vector.broadcast %333 : vector<17x1xf32> to vector<17x32xf32>
    %335 = arith.mulf %330, %334 : vector<17x32xf32>
    %c0_154 = arith.constant 0 : index
    %c0_155 = arith.constant 0 : index
    %336 = vector.load %arg6[%c0_154, %c0_155] : memref<1x32xf32, #tpu.memory_space<vmem>>, vector<1x32xf32>
    %337 = vector.broadcast %336 : vector<1x32xf32> to vector<17x32xf32>
    %338 = arith.mulf %335, %337 : vector<17x32xf32>
    %c0_156 = arith.constant 0 : index
    %c0_157 = arith.constant 0 : index
    %339 = vector.load %arg7[%c0_156, %c0_157] : memref<1x32xf32, #tpu.memory_space<vmem>>, vector<1x32xf32>
    %340 = vector.broadcast %339 : vector<1x32xf32> to vector<17x32xf32>
    %341 = arith.addf %338, %340 : vector<17x32xf32>
    %342 = vector.extract_strided_slice %341 {offsets = [1, 0], sizes = [16, 32], strides = [1, 1]} : vector<17x32xf32> to vector<16x32xf32>
    %343 = vector.extract_strided_slice %341 {offsets = [0, 0], sizes = [1, 32], strides = [1, 1]} : vector<17x32xf32> to vector<1x32xf32>
    %cst_158 = arith.constant 2.000000e+00 : f32
    %344 = vector.broadcast %cst_158 : f32 to vector<1x32xf32>
    %345 = arith.mulf %344, %343 : vector<1x32xf32>
    %346 = vector.broadcast %345 : vector<1x32xf32> to vector<16x32xf32>
    %347 = arith.addf %342, %346 : vector<16x32xf32>
    %cst_159 = arith.constant 1.000000e+00 : f32
    %348 = vector.broadcast %cst_159 : f32 to vector<16x32xf32>
    %349 = arith.mulf %86, %348 : vector<16x32xf32>
    %350 = arith.mulf %349, %349 : vector<16x32xf32>
    %cst_160 = arith.constant dense<0.000000e+00> : vector<16xf32>
    %351 = vector.multi_reduction <add>, %350, %cst_160 [1] : vector<16x32xf32> to vector<16xf32>
    %352 = vector.shape_cast %351 : vector<16xf32> to vector<16x1xf32>
    %353 = math.sqrt %352 : vector<16x1xf32>
    %cst_161 = arith.constant 9.99999996E-13 : f32
    %354 = vector.broadcast %cst_161 : f32 to vector<16x1xf32>
    %355 = arith.maximumf %353, %354 : vector<16x1xf32>
    %356 = vector.broadcast %355 : vector<16x1xf32> to vector<16x32xf32>
    %357 = arith.divf %349, %356 : vector<16x32xf32>
    %cst_162 = arith.constant dense<0.000000e+00> : vector<16xf32>
    %358 = vector.multi_reduction <add>, %357, %cst_162 [1] : vector<16x32xf32> to vector<16xf32>
    %359 = vector.shape_cast %358 : vector<16xf32> to vector<16x1xf32>
    %cst_163 = arith.constant 3.200000e+01 : f32
    %360 = vector.broadcast %cst_163 : f32 to vector<16x1xf32>
    %361 = arith.divf %359, %360 : vector<16x1xf32>
    %362 = vector.broadcast %361 : vector<16x1xf32> to vector<16x32xf32>
    %363 = arith.subf %357, %362 : vector<16x32xf32>
    %c0_164 = arith.constant 0 : index
    %c0_165 = arith.constant 0 : index
    %c0_166 = arith.constant 0 : index
    %364 = vector.load %arg8[%c0_164, %c0_165, %c0_166] : memref<4x16x32xf32, #tpu.memory_space<vmem>>, vector<1x16x32xf32>
    %365 = vector.shape_cast %364 : vector<1x16x32xf32> to vector<16x32xf32>
    %366 = vector.shape_cast %363 : vector<16x32xf32> to vector<1x16x32xf32>
    tpu.vector_store %arg8[%c0_164, %c0_165, %c0_166], %366 {strides = array<i32>} : memref<4x16x32xf32, #tpu.memory_space<vmem>>, vector<1x16x32xf32>,
    %cst_167 = arith.constant 1.000000e+00 : f32
    %367 = vector.broadcast %cst_167 : f32 to vector<16x32xf32>
    %368 = arith.mulf %173, %367 : vector<16x32xf32>
    %369 = arith.mulf %368, %368 : vector<16x32xf32>
    %cst_168 = arith.constant dense<0.000000e+00> : vector<16xf32>
    %370 = vector.multi_reduction <add>, %369, %cst_168 [1] : vector<16x32xf32> to vector<16xf32>
    %371 = vector.shape_cast %370 : vector<16xf32> to vector<16x1xf32>
    %372 = math.sqrt %371 : vector<16x1xf32>
    %cst_169 = arith.constant 9.99999996E-13 : f32
    %373 = vector.broadcast %cst_169 : f32 to vector<16x1xf32>
    %374 = arith.maximumf %372, %373 : vector<16x1xf32>
    %375 = vector.broadcast %374 : vector<16x1xf32> to vector<16x32xf32>
    %376 = arith.divf %368, %375 : vector<16x32xf32>
    %cst_170 = arith.constant dense<0.000000e+00> : vector<16xf32>
    %377 = vector.multi_reduction <add>, %376, %cst_170 [1] : vector<16x32xf32> to vector<16xf32>
    %378 = vector.shape_cast %377 : vector<16xf32> to vector<16x1xf32>
    %cst_171 = arith.constant 3.200000e+01 : f32
    %379 = vector.broadcast %cst_171 : f32 to vector<16x1xf32>
    %380 = arith.divf %378, %379 : vector<16x1xf32>
    %381 = vector.broadcast %380 : vector<16x1xf32> to vector<16x32xf32>
    %382 = arith.subf %376, %381 : vector<16x32xf32>
    %c1_172 = arith.constant 1 : index
    %c0_173 = arith.constant 0 : index
    %c0_174 = arith.constant 0 : index
    %383 = vector.load %arg8[%c1_172, %c0_173, %c0_174] : memref<4x16x32xf32, #tpu.memory_space<vmem>>, vector<1x16x32xf32>
    %384 = vector.shape_cast %383 : vector<1x16x32xf32> to vector<16x32xf32>
    %385 = vector.shape_cast %382 : vector<16x32xf32> to vector<1x16x32xf32>
    tpu.vector_store %arg8[%c1_172, %c0_173, %c0_174], %385 {strides = array<i32>} : memref<4x16x32xf32, #tpu.memory_space<vmem>>, vector<1x16x32xf32>,
    %cst_175 = arith.constant 1.000000e+00 : f32
    %386 = vector.broadcast %cst_175 : f32 to vector<16x32xf32>
    %387 = arith.mulf %260, %386 : vector<16x32xf32>
    %388 = arith.mulf %387, %387 : vector<16x32xf32>
    %cst_176 = arith.constant dense<0.000000e+00> : vector<16xf32>
    %389 = vector.multi_reduction <add>, %388, %cst_176 [1] : vector<16x32xf32> to vector<16xf32>
    %390 = vector.shape_cast %389 : vector<16xf32> to vector<16x1xf32>
    %391 = math.sqrt %390 : vector<16x1xf32>
    %cst_177 = arith.constant 9.99999996E-13 : f32
    %392 = vector.broadcast %cst_177 : f32 to vector<16x1xf32>
    %393 = arith.maximumf %391, %392 : vector<16x1xf32>
    %394 = vector.broadcast %393 : vector<16x1xf32> to vector<16x32xf32>
    %395 = arith.divf %387, %394 : vector<16x32xf32>
    %cst_178 = arith.constant dense<0.000000e+00> : vector<16xf32>
    %396 = vector.multi_reduction <add>, %395, %cst_178 [1] : vector<16x32xf32> to vector<16xf32>
    %397 = vector.shape_cast %396 : vector<16xf32> to vector<16x1xf32>
    %cst_179 = arith.constant 3.200000e+01 : f32
    %398 = vector.broadcast %cst_179 : f32 to vector<16x1xf32>
    %399 = arith.divf %397, %398 : vector<16x1xf32>
    %400 = vector.broadcast %399 : vector<16x1xf32> to vector<16x32xf32>
    %401 = arith.subf %395, %400 : vector<16x32xf32>
    %c2_180 = arith.constant 2 : index
    %c0_181 = arith.constant 0 : index
    %c0_182 = arith.constant 0 : index
    %402 = vector.load %arg8[%c2_180, %c0_181, %c0_182] : memref<4x16x32xf32, #tpu.memory_space<vmem>>, vector<1x16x32xf32>
    %403 = vector.shape_cast %402 : vector<1x16x32xf32> to vector<16x32xf32>
    %404 = vector.shape_cast %401 : vector<16x32xf32> to vector<1x16x32xf32>
    tpu.vector_store %arg8[%c2_180, %c0_181, %c0_182], %404 {strides = array<i32>} : memref<4x16x32xf32, #tpu.memory_space<vmem>>, vector<1x16x32xf32>,
    %cst_183 = arith.constant 1.000000e+00 : f32
    %405 = vector.broadcast %cst_183 : f32 to vector<16x32xf32>
    %406 = arith.mulf %347, %405 : vector<16x32xf32>
    %407 = arith.mulf %406, %406 : vector<16x32xf32>
    %cst_184 = arith.constant dense<0.000000e+00> : vector<16xf32>
    %408 = vector.multi_reduction <add>, %407, %cst_184 [1] : vector<16x32xf32> to vector<16xf32>
    %409 = vector.shape_cast %408 : vector<16xf32> to vector<16x1xf32>
    %410 = math.sqrt %409 : vector<16x1xf32>
    %cst_185 = arith.constant 9.99999996E-13 : f32
    %411 = vector.broadcast %cst_185 : f32 to vector<16x1xf32>
    %412 = arith.maximumf %410, %411 : vector<16x1xf32>
    %413 = vector.broadcast %412 : vector<16x1xf32> to vector<16x32xf32>
    %414 = arith.divf %406, %413 : vector<16x32xf32>
    %cst_186 = arith.constant dense<0.000000e+00> : vector<16xf32>
    %415 = vector.multi_reduction <add>, %414, %cst_186 [1] : vector<16x32xf32> to vector<16xf32>
    %416 = vector.shape_cast %415 : vector<16xf32> to vector<16x1xf32>
    %cst_187 = arith.constant 3.200000e+01 : f32
    %417 = vector.broadcast %cst_187 : f32 to vector<16x1xf32>
    %418 = arith.divf %416, %417 : vector<16x1xf32>
    %419 = vector.broadcast %418 : vector<16x1xf32> to vector<16x32xf32>
    %420 = arith.subf %414, %419 : vector<16x32xf32>
    %c3_188 = arith.constant 3 : index
    %c0_189 = arith.constant 0 : index
    %c0_190 = arith.constant 0 : index
    %421 = vector.load %arg8[%c3_188, %c0_189, %c0_190] : memref<4x16x32xf32, #tpu.memory_space<vmem>>, vector<1x16x32xf32>
    %422 = vector.shape_cast %421 : vector<1x16x32xf32> to vector<16x32xf32>
    %423 = vector.shape_cast %420 : vector<16x32xf32> to vector<1x16x32xf32>
    tpu.vector_store %arg8[%c3_188, %c0_189, %c0_190], %423 {strides = array<i32>} : memref<4x16x32xf32, #tpu.memory_space<vmem>>, vector<1x16x32xf32>,
    return
  }
  func.func @transform_0(%arg0: i32) -> (i32, i32, i32) {
    %c0_i32 = arith.constant 0 : i32
    %c0_i32_0 = arith.constant 0 : i32
    %c0_i32_1 = arith.constant 0 : i32
    %c0_i32_2 = arith.constant 0 : i32
    return %c0_i32, %c0_i32_0, %c0_i32_1 : i32, i32, i32
  }
  func.func @transform_1(%arg0: i32) -> (i32, i32) {
    %c0_i32 = arith.constant 0 : i32
    %c0_i32_0 = arith.constant 0 : i32
    %c0_i32_1 = arith.constant 0 : i32
    return %c0_i32, %c0_i32_0 : i32, i32
  }
  func.func @transform_2(%arg0: i32) -> (i32, i32) {
    %c0_i32 = arith.constant 0 : i32
    %c0_i32_0 = arith.constant 0 : i32
    %c0_i32_1 = arith.constant 0 : i32
    return %c0_i32, %c0_i32_0 : i32, i32
  }
  func.func @transform_3(%arg0: i32) -> (i32, i32) {
    %c0_i32 = arith.constant 0 : i32
    %c0_i32_0 = arith.constant 0 : i32
    %c0_i32_1 = arith.constant 0 : i32
    return %c0_i32, %c0_i32_0 : i32, i32
  }
  func.func @transform_4(%arg0: i32) -> (i32, i32) {
    %c0_i32 = arith.constant 0 : i32
    %c0_i32_0 = arith.constant 0 : i32
    %c0_i32_1 = arith.constant 0 : i32
    return %c0_i32, %c0_i32_0 : i32, i32
  }
  func.func @transform_5(%arg0: i32) -> (i32, i32) {
    %c0_i32 = arith.constant 0 : i32
    %c0_i32_0 = arith.constant 0 : i32
    %c0_i32_1 = arith.constant 0 : i32
    return %c0_i32, %c0_i32_0 : i32, i32
  }
  func.func @transform_6(%arg0: i32) -> (i32, i32) {
    %c0_i32 = arith.constant 0 : i32
    %c0_i32_0 = arith.constant 0 : i32
    %c0_i32_1 = arith.constant 0 : i32
    return %c0_i32, %c0_i32_0 : i32, i32
  }
  func.func @transform_7(%arg0: i32) -> (i32, i32, i32) {
    %c0_i32 = arith.constant 0 : i32
    %c0_i32_0 = arith.constant 0 : i32
    %c0_i32_1 = arith.constant 0 : i32
    %c0_i32_2 = arith.constant 0 : i32
    return %c0_i32, %c0_i32_0, %c0_i32_1 : i32, i32, i32
  }
}

</mosaic_0001>

<llo_original>
// kernel: tpu_custom_call.1
$region0: #{tpu_custom_call.1}
  #allocation0 [shape = 'u32[]', space=smem, size = 0x4, offset = 0x4, fixed_abs, tag = 'smem constant byte address 0x4 - core index']
  #allocation1 [shape = 'u32[144,128]{1,0:T(1,128)}', space=vmem, size = 0x12000, scoped, tag = 'internal scratch']
  %s0 = inlined_call_operand.vmem [shape: f32[4,17,32], index: 0, kind: input, shape index: {}]
  %s1 = inlined_call_operand.vmem [shape: f32[32,8], index: 1, kind: input, shape index: {}]
  %s2 = inlined_call_operand.vmem [shape: f32[1,8], index: 2, kind: input, shape index: {}]
  %s3 = inlined_call_operand.vmem [shape: f32[8,32], index: 3, kind: input, shape index: {}]
  %s4 = inlined_call_operand.vmem [shape: f32[1,32], index: 4, kind: input, shape index: {}]
  %s5 = inlined_call_operand.vmem [shape: f32[1,32], index: 5, kind: input, shape index: {}]
  %s6 = inlined_call_operand.vmem [shape: f32[1,32], index: 6, kind: input, shape index: {}]
  %s7 = inlined_call_operand.hbm [shape: f32[4,16,32], index: 7, kind: output, shape index: {}]
  %s8 = sld [smem:[#allocation0]]
  $region38: #{tpu_custom_call.1} parent=0
    _
  %s10 = ssub.s32 1, %s8
  %s11 = scalar_select 0, %s10, %s8
  $region1: #{tpu_custom_call.1} parent=0
    #allocation2 [shape = 'u8[32768]{0}', space=vmem, size = 0x8000, scoped, tag = 'output window, operand 0, single buffered']
    #allocation3 [shape = 's32[1]{0}', space=sflag, size = 0x4, scoped, tag = 'scoped memory for tpu_custom_call.1']
    %12 = vsyncpa [#allocation3], 0
    // Predicated region
    $region2: #{tpu_custom_call.1} parent=1 // pred_check
      _
    $region3: #{tpu_custom_call.1} parent=1 // pred_check_branch
      %14 = sbr.rel (0) target = $region5
    $region4: #{tpu_custom_call.1} parent=1 // pred_region
      _
    $region5: #{tpu_custom_call.1} parent=1 // pred_fallthru
      _
    // Predicated region
    $region6: #{tpu_custom_call.1} parent=1 // pred_check
      _
    $region7: #{tpu_custom_call.1} parent=1 // pred_check_branch
      %16 = sbr.rel (0) target = $region9
    $region8: #{tpu_custom_call.1} parent=1 // pred_region
      _
    $region9: #{tpu_custom_call.1} parent=1 // pred_fallthru
      _
    // Predicated region
    $region10: #{tpu_custom_call.1} parent=1 // pred_check
      _
    $region11: #{tpu_custom_call.1} parent=1 // pred_check_branch
      %18 = sbr.rel (0) target = $region13
    $region12: #{tpu_custom_call.1} parent=1 // pred_region
      _
    $region13: #{tpu_custom_call.1} parent=1 // pred_fallthru
      _
    // Predicated region
    $region14: #{tpu_custom_call.1} parent=1 // pred_check
      _
    $region15: #{tpu_custom_call.1} parent=1 // pred_check_branch
      %20 = sbr.rel (0) target = $region17
    $region16: #{tpu_custom_call.1} parent=1 // pred_region
      _
    $region17: #{tpu_custom_call.1} parent=1 // pred_fallthru
      _
    // Predicated region
    $region18: #{tpu_custom_call.1} parent=1 // pred_check
      _
    $region19: #{tpu_custom_call.1} parent=1 // pred_check_branch
      %22 = sbr.rel (0) target = $region21
    $region20: #{tpu_custom_call.1} parent=1 // pred_region
      _
    $region21: #{tpu_custom_call.1} parent=1 // pred_fallthru
      _
    // Predicated region
    $region22: #{tpu_custom_call.1} parent=1 // pred_check
      _
    $region23: #{tpu_custom_call.1} parent=1 // pred_check_branch
      %24 = sbr.rel (0) target = $region25
    $region24: #{tpu_custom_call.1} parent=1 // pred_region
      _
    $region25: #{tpu_custom_call.1} parent=1 // pred_fallthru
      _
    // Predicated region
    $region26: #{tpu_custom_call.1} parent=1 // pred_check
      _
    $region27: #{tpu_custom_call.1} parent=1 // pred_check_branch
      %26 = sbr.rel (0) target = $region29
    $region28: #{tpu_custom_call.1} parent=1 // pred_region
      _
    $region29: #{tpu_custom_call.1} parent=1 // pred_fallthru
      _
    %v27 = vld [vmem:[%s0] sm:$0xff]
    %v28 = vld [vmem:[%s0 + $0x8] sm:$0xff]
    %v29 = vld [vmem:[%s0 + $0x10] sm:$0x1]
    %vm30 = vcmask 261120
    %v31 = vsel %vm30, %v27, 0.0
    %v32 = vsel %vm30, %v28, 0.0
    %v33 = vadd.f32 %v31, %v32
    %vm34 = vcmask 253952
    %v35 = vsel %vm34, %v29, 0.0
    %v36 = vadd.f32 %v33, %v35
    %v37 = vrot.slane %v36, 4
    %v38 = vadd.f32 %v36, %v37
    %v39 = vrot.slane %v38, 2
    %v40 = vadd.f32 %v38, %v39
    %v41 = vrot.slane %v40, 1
    %v42 = vadd.f32 %v40, %v41
    %v43 = vrcp.pop 17.0
    %v44 = vmul.f32 %v42, %v43
    %v45 = vld [vmem:[%s1] sm:$0xff]
    %v46 = vld [vmem:[%s1 + $0x8] sm:$0xff]
    %v47 = vld [vmem:[%s1 + $0x10] sm:$0xff]
    %v48 = vld [vmem:[%s1 + $0x18] sm:$0xff]
    %v49 = vld [vmem:[%s2] sm:$0x1]
    %v51 = vsel %vm30, %v44, 0
    %53 = vmatprep.subr.mxu0 0.0
    %54 = vmatpush1.msra.mxu0 0.0
    %55 = vmatprep.subr.mxu0 0.0
    %56 = vmatpush1.msra.mxu0 0.0
    %57 = vmatprep.subr.mxu0 0.0
    %58 = vmatpush1.msra.mxu0 0.0
    %59 = vmatprep.subr.mxu0 0.0
    %60 = vmatpush1.msra.mxu0 0.0
    %61 = vmatprep.subr.mxu0 0.0
    %62 = vmatpush1.msra.mxu0 0.0
    %63 = vmatprep.subr.mxu0 0.0
    %64 = vmatpush1.msra.mxu0 0.0
    %65 = vmatprep.subr.mxu0 0.0
    %66 = vmatpush1.msra.mxu0 0.0
    %67 = vmatprep.subr.mxu0 0.0
    %68 = vmatpush1.msra.mxu0 0.0
    %69 = vmatprep.subr.mxu0 0.0
    %70 = vmatpush1.msra.mxu0 0.0
    %71 = vmatprep.subr.mxu0 0.0
    %72 = vmatpush1.msra.mxu0 0.0
    %73 = vmatprep.subr.mxu0 0.0
    %74 = vmatpush1.msra.mxu0 0.0
    %75 = vmatprep.subr.mxu0 0.0
    %76 = vmatpush1.msra.mxu0 0.0
    %77 = vmatprep.subr.mxu0 0.0
    %78 = vmatpush1.msra.mxu0 %v48
    %79 = vmatprep.subr.mxu0 0.0
    %80 = vmatpush1.msra.mxu0 %v47
    %81 = vmatprep.subr.mxu0 0.0
    %82 = vmatpush1.msra.mxu0 %v46
    %83 = vmatprep.subr.mxu0 0.0
    %84 = vmatpush1.msra.mxu0 %v45
    %85 = vmatprep.subr.mxu0 0.0
    %86 = vmatpush2.msra.mxu0 0.0
    %87 = vmatprep.subr.mxu0 0.0
    %88 = vmatpush2.msra.mxu0 0.0
    %89 = vmatprep.subr.mxu0 0.0
    %90 = vmatpush2.msra.mxu0 0.0
    %91 = vmatprep.subr.mxu0 0.0
    %92 = vmatpush2.msra.mxu0 0.0
    %93 = vmatprep.subr.mxu0 0.0
    %94 = vmatpush2.msra.mxu0 0.0
    %95 = vmatprep.subr.mxu0 0.0
    %96 = vmatpush2.msra.mxu0 0.0
    %97 = vmatprep.subr.mxu0 0.0
    %98 = vmatpush2.msra.mxu0 0.0
    %99 = vmatprep.subr.mxu0 0.0
    %100 = vmatpush2.msra.mxu0 0.0
    %101 = vmatprep.subr.mxu0 0.0
    %102 = vmatpush2.msra.mxu0 0.0
    %103 = vmatprep.subr.mxu0 0.0
    %104 = vmatpush2.msra.mxu0 0.0
    %105 = vmatprep.subr.mxu0 0.0
    %106 = vmatpush2.msra.mxu0 0.0
    %107 = vmatprep.subr.mxu0 0.0
    %108 = vmatpush2.msra.mxu0 0.0
    %109 = vmatprep.subr.mxu0 0.0
    %110 = vmatpush2.msra.mxu0 0.0
    %111 = vmatprep.subr.mxu0 0.0
    %112 = vmatpush2.msra.mxu0 0.0
    %113 = vmatprep.subr.mxu0 0.0
    %114 = vmatpush2.msra.mxu0 0.0
    %115 = vmatprep.subr.mxu0 0.0
    %116 = vmatpush2.msra.mxu0 0.0
    %117 = vmatprep.mubr.f32.mxu0 0.0
    %118 = vmatmul.mubr.f32.gmra.mxu0 %v51
    %v119 = vpop.f32.mrf.mxu0
    %v120 = vadd.f32 %v49, %v119
    %v121 = vpop.f32.mrf.mxu0
    %122 = vdwg.mxu0
    %v123 = vmul.f32 %v120, 0.5
    %v124 = vmul.f32 %v120, 0.70710677
    %vm125 = vcmp.ge.f32.partialorder %v124, 0.0
    %v126 = vsel %vm125, 1.0, -1.0
    %v127 = vand.u32 2147483647, %v124
    %v128 = vmul.f32 %v127, 0.3275911
    %v129 = vadd.f32 %v128, 1.0
    %v130 = vrcp.pop %v129
    %v131 = vmul.f32 1.0, %v130
    %v132 = vmul.f32 %v131, 1.0614054
    %v133 = vadd.f32 %v132, -1.4531521
    %v134 = vmul.f32 %v133, %v131
    %v135 = vadd.f32 %v134, 1.4214138
    %v136 = vmul.f32 %v135, %v131
    %v137 = vadd.f32 %v136, -0.28449672
    %v138 = vmul.f32 %v137, %v131
    %v139 = vadd.f32 %v138, 0.2548296
    %v140 = vmul.f32 %v139, %v131
    %v141 = vsub.f32 0.0, %v127
    %v142 = vmul.f32 %v141, %v127
    %v143 = vmul.f32 %v142, 1.442695
    %v144 = vpow.pop %v143
    %v145 = vmul.f32 %v140, %v144
    %v146 = vsub.f32 1.0, %v145
    %v147 = vmul.f32 %v126, %v146
    %v148 = vadd.f32 %v147, 1.0
    %v149 = vmul.f32 %v123, %v148
    %v150 = vld [vmem:[%s3] sm:$0xff]
    %v151 = vld [vmem:[%s4] sm:$0x1]
    %vm152 = vcmask 64512
    %v154 = vsel %vm152, %v149, 0
    %156 = vmatprep.subr.mxu0 0.0
    %157 = vmatpush1.msra.mxu0 0.0
    %158 = vmatprep.subr.mxu0 0.0
    %159 = vmatpush1.msra.mxu0 0.0
    %160 = vmatprep.subr.mxu0 0.0
    %161 = vmatpush1.msra.mxu0 0.0
    %162 = vmatprep.subr.mxu0 0.0
    %163 = vmatpush1.msra.mxu0 0.0
    %164 = vmatprep.subr.mxu0 0.0
    %165 = vmatpush1.msra.mxu0 0.0
    %166 = vmatprep.subr.mxu0 0.0
    %167 = vmatpush1.msra.mxu0 0.0
    %168 = vmatprep.subr.mxu0 0.0
    %169 = vmatpush1.msra.mxu0 0.0
    %170 = vmatprep.subr.mxu0 0.0
    %171 = vmatpush1.msra.mxu0 0.0
    %172 = vmatprep.subr.mxu0 0.0
    %173 = vmatpush1.msra.mxu0 0.0
    %174 = vmatprep.subr.mxu0 0.0
    %175 = vmatpush1.msra.mxu0 0.0
    %176 = vmatprep.subr.mxu0 0.0
    %177 = vmatpush1.msra.mxu0 0.0
    %178 = vmatprep.subr.mxu0 0.0
    %179 = vmatpush1.msra.mxu0 0.0
    %180 = vmatprep.subr.mxu0 0.0
    %181 = vmatpush1.msra.mxu0 0.0
    %182 = vmatprep.subr.mxu0 0.0
    %183 = vmatpush1.msra.mxu0 0.0
    %184 = vmatprep.subr.mxu0 0.0
    %185 = vmatpush1.msra.mxu0 0.0
    %186 = vmatprep.subr.mxu0 0.0
    %187 = vmatpush1.msra.mxu0 %v150
    %188 = vmatprep.subr.mxu0 0.0
    %189 = vmatpush2.msra.mxu0 0.0
    %190 = vmatprep.subr.mxu0 0.0
    %191 = vmatpush2.msra.mxu0 0.0
    %192 = vmatprep.subr.mxu0 0.0
    %193 = vmatpush2.msra.mxu0 0.0
    %194 = vmatprep.subr.mxu0 0.0
    %195 = vmatpush2.msra.mxu0 0.0
    %196 = vmatprep.subr.mxu0 0.0
    %197 = vmatpush2.msra.mxu0 0.0
    %198 = vmatprep.subr.mxu0 0.0
    %199 = vmatpush2.msra.mxu0 0.0
    %200 = vmatprep.subr.mxu0 0.0
    %201 = vmatpush2.msra.mxu0 0.0
    %202 = vmatprep.subr.mxu0 0.0
    %203 = vmatpush2.msra.mxu0 0.0
    %204 = vmatprep.subr.mxu0 0.0
    %205 = vmatpush2.msra.mxu0 0.0
    %206 = vmatprep.subr.mxu0 0.0
    %207 = vmatpush2.msra.mxu0 0.0
    %208 = vmatprep.subr.mxu0 0.0
    %209 = vmatpush2.msra.mxu0 0.0
    %210 = vmatprep.subr.mxu0 0.0
    %211 = vmatpush2.msra.mxu0 0.0
    %212 = vmatprep.subr.mxu0 0.0
    %213 = vmatpush2.msra.mxu0 0.0
    %214 = vmatprep.subr.mxu0 0.0
    %215 = vmatpush2.msra.mxu0 0.0
    %216 = vmatprep.subr.mxu0 0.0
    %217 = vmatpush2.msra.mxu0 0.0
    %218 = vmatprep.subr.mxu0 0.0
    %219 = vmatpush2.msra.mxu0 0.0
    %220 = vmatprep.mubr.f32.mxu0 0.0
    %221 = vmatmul.mubr.f32.gmra.mxu0 %v154
    %v222 = vpop.f32.mrf.mxu0
    %v223 = vadd.f32 %v151, %v222
    %v224 = vpop.f32.mrf.mxu0
    %225 = vdwg.mxu0
    %v226 = vlaneseq
    %v227 = vshrl.u32 %v226, 7
    %v228 = vsub.s32 0, %v227
    %v229 = vrot.slane %v223, %v228
    %v230 = vadd.f32 %v27, %v229
    %v231 = vadd.f32 %v28, %v229
    %v232 = vadd.f32 %v29, %v229
    %v233 = vsel %vm30, %v230, 0.0
    %234 = vadd.xlane.f32.xlu0 %v233
    %v235 = vpop.xlane.xlu0 %234
    %v236 = vsel %vm30, %v231, 0.0
    %237 = vadd.xlane.f32.xlu0 %v236
    %v238 = vpop.xlane.xlu0 %237
    %v239 = vsel %vm34, %v232, 0.0
    %240 = vadd.xlane.f32.xlu0 %v239
    %v241 = vpop.xlane.xlu0 %240
    %v242 = vrcp.pop 32.0
    %v243 = vmul.f32 %v235, %v242
    %v244 = vmul.f32 %v238, %v242
    %v245 = vmul.f32 %v241, %v242
    %v246 = vsub.f32 %v230, %v243
    %v247 = vsub.f32 %v231, %v244
    %v248 = vsub.f32 %v232, %v245
    %v249 = vmul.f32 %v246, %v246
    %v250 = vmul.f32 %v247, %v247
    %v251 = vmul.f32 %v248, %v248
    %v252 = vsel %vm30, %v249, 0.0
    %253 = vadd.xlane.f32.xlu0 %v252
    %v254 = vpop.xlane.xlu0 %253
    %v255 = vsel %vm30, %v250, 0.0
    %256 = vadd.xlane.f32.xlu0 %v255
    %v257 = vpop.xlane.xlu0 %256
    %v258 = vsel %vm34, %v251, 0.0
    %259 = vadd.xlane.f32.xlu0 %v258
    %v260 = vpop.xlane.xlu0 %259
    %v261 = vmul.f32 %v254, %v242
    %v262 = vmul.f32 %v257, %v242
    %v263 = vmul.f32 %v260, %v242
    %v264 = vadd.f32 %v261, 1e-05
    %v265 = vadd.f32 %v262, 1e-05
    %v266 = vadd.f32 %v263, 1e-05
    %v267 = vrsqrt.pop %v264
    %v268 = vrsqrt.pop %v265
    %v269 = vrsqrt.pop %v266
    %v270 = vmul.f32 %v246, %v267
    %v271 = vmul.f32 %v247, %v268
    %v272 = vmul.f32 %v248, %v269
    %v273 = vld [vmem:[%s5] sm:$0x1]
    %v275 = vlaneseq
    %v276 = vshrl.u32 %v275, 7
    %v277 = vsub.s32 0, %v276
    %v278 = vrot.slane %v273, %v277
    %v280 = vmul.f32 %v270, %v278
    %v281 = vmul.f32 %v271, %v278
    %v282 = vmul.f32 %v272, %v278
    %v283 = vld [vmem:[%s6] sm:$0x1]
    %v285 = vlaneseq
    %v286 = vshrl.u32 %v285, 7
    %v287 = vsub.s32 0, %v286
    %v288 = vrot.slane %v283, %v287
    %v290 = vadd.f32 %v280, %v288
    %v291 = vadd.f32 %v281, %v288
    %v292 = vadd.f32 %v282, %v288
    %v293 = vmul.f32 %v290, 2.0
    %v294 = vlaneseq
    %v295 = vshrl.u32 %v294, 7
    %v296 = vsub.s32 0, %v295
    %v297 = vrot.slane %v293, %v296
    %v298 = vadd.f32 %v290, %v297
    %v299 = vadd.f32 %v291, %v297
    %v300 = vadd.f32 %v292, %v297
    %s301 = scalar_lea.vmem %s0, 24
    %v302 = vld [vmem:[%s301] sm:$0xff]
    %v303 = vld [vmem:[%s301 + $0x8] sm:$0xff]
    %v304 = vld [vmem:[%s301 + $0x10] sm:$0x1]
    %v305 = vsel %vm30, %v302, 0.0
    %v306 = vsel %vm30, %v303, 0.0
    %v307 = vadd.f32 %v305, %v306
    %v308 = vsel %vm34, %v304, 0.0
    %v309 = vadd.f32 %v307, %v308
    %v310 = vrot.slane %v309, 4
    %v311 = vadd.f32 %v309, %v310
    %v312 = vrot.slane %v311, 2
    %v313 = vadd.f32 %v311, %v312
    %v314 = vrot.slane %v313, 1
    %v315 = vadd.f32 %v313, %v314
    %v316 = vmul.f32 %v315, %v43
    %v318 = vsel %vm30, %v316, 0
    %320 = vmatprep.subr.mxu0 0.0
    %321 = vmatpush1.msra.mxu0 0.0
    %322 = vmatprep.subr.mxu0 0.0
    %323 = vmatpush1.msra.mxu0 0.0
    %324 = vmatprep.subr.mxu0 0.0
    %325 = vmatpush1.msra.mxu0 0.0
    %326 = vmatprep.subr.mxu0 0.0
    %327 = vmatpush1.msra.mxu0 0.0
    %328 = vmatprep.subr.mxu0 0.0
    %329 = vmatpush1.msra.mxu0 0.0
    %330 = vmatprep.subr.mxu0 0.0
    %331 = vmatpush1.msra.mxu0 0.0
    %332 = vmatprep.subr.mxu0 0.0
    %333 = vmatpush1.msra.mxu0 0.0
    %334 = vmatprep.subr.mxu0 0.0
    %335 = vmatpush1.msra.mxu0 0.0
    %336 = vmatprep.subr.mxu0 0.0
    %337 = vmatpush1.msra.mxu0 0.0
    %338 = vmatprep.subr.mxu0 0.0
    %339 = vmatpush1.msra.mxu0 0.0
    %340 = vmatprep.subr.mxu0 0.0
    %341 = vmatpush1.msra.mxu0 0.0
    %342 = vmatprep.subr.mxu0 0.0
    %343 = vmatpush1.msra.mxu0 0.0
    %344 = vmatprep.subr.mxu0 0.0
    %345 = vmatpush1.msra.mxu0 %v48
    %346 = vmatprep.subr.mxu0 0.0
    %347 = vmatpush1.msra.mxu0 %v47
    %348 = vmatprep.subr.mxu0 0.0
    %349 = vmatpush1.msra.mxu0 %v46
    %350 = vmatprep.subr.mxu0 0.0
    %351 = vmatpush1.msra.mxu0 %v45
    %352 = vmatprep.subr.mxu0 0.0
    %353 = vmatpush2.msra.mxu0 0.0
    %354 = vmatprep.subr.mxu0 0.0
    %355 = vmatpush2.msra.mxu0 0.0
    %356 = vmatprep.subr.mxu0 0.0
    %357 = vmatpush2.msra.mxu0 0.0
    %358 = vmatprep.subr.mxu0 0.0
    %359 = vmatpush2.msra.mxu0 0.0
    %360 = vmatprep.subr.mxu0 0.0
    %361 = vmatpush2.msra.mxu0 0.0
    %362 = vmatprep.subr.mxu0 0.0
    %363 = vmatpush2.msra.mxu0 0.0
    %364 = vmatprep.subr.mxu0 0.0
    %365 = vmatpush2.msra.mxu0 0.0
    %366 = vmatprep.subr.mxu0 0.0
    %367 = vmatpush2.msra.mxu0 0.0
    %368 = vmatprep.subr.mxu0 0.0
    %369 = vmatpush2.msra.mxu0 0.0
    %370 = vmatprep.subr.mxu0 0.0
    %371 = vmatpush2.msra.mxu0 0.0
    %372 = vmatprep.subr.mxu0 0.0
    %373 = vmatpush2.msra.mxu0 0.0
    %374 = vmatprep.subr.mxu0 0.0
    %375 = vmatpush2.msra.mxu0 0.0
    %376 = vmatprep.subr.mxu0 0.0
    %377 = vmatpush2.msra.mxu0 0.0
    %378 = vmatprep.subr.mxu0 0.0
    %379 = vmatpush2.msra.mxu0 0.0
    %380 = vmatprep.subr.mxu0 0.0
    %381 = vmatpush2.msra.mxu0 0.0
    %382 = vmatprep.subr.mxu0 0.0
    %383 = vmatpush2.msra.mxu0 0.0
    %384 = vmatprep.mubr.f32.mxu0 0.0
    %385 = vmatmul.mubr.f32.gmra.mxu0 %v318
    %v386 = vpop.f32.mrf.mxu0
    %v387 = vadd.f32 %v49, %v386
    %v388 = vpop.f32.mrf.mxu0
    %389 = vdwg.mxu0
    %v390 = vmul.f32 %v387, 0.5
    %v391 = vmul.f32 %v387, 0.70710677
    %vm392 = vcmp.ge.f32.partialorder %v391, 0.0
    %v393 = vsel %vm392, 1.0, -1.0
    %v394 = vand.u32 2147483647, %v391
    %v395 = vmul.f32 %v394, 0.3275911
    %v396 = vadd.f32 %v395, 1.0
    %v397 = vrcp.pop %v396
    %v398 = vmul.f32 1.0, %v397
    %v399 = vmul.f32 %v398, 1.0614054
    %v400 = vadd.f32 %v399, -1.4531521
    %v401 = vmul.f32 %v400, %v398
    %v402 = vadd.f32 %v401, 1.4214138
    %v403 = vmul.f32 %v402, %v398
    %v404 = vadd.f32 %v403, -0.28449672
    %v405 = vmul.f32 %v404, %v398
    %v406 = vadd.f32 %v405, 0.2548296
    %v407 = vmul.f32 %v406, %v398
    %v408 = vsub.f32 0.0, %v394
    %v409 = vmul.f32 %v408, %v394
    %v410 = vmul.f32 %v409, 1.442695
    %v411 = vpow.pop %v410
    %v412 = vmul.f32 %v407, %v411
    %v413 = vsub.f32 1.0, %v412
    %v414 = vmul.f32 %v393, %v413
    %v415 = vadd.f32 %v414, 1.0
    %v416 = vmul.f32 %v390, %v415
    %v418 = vsel %vm152, %v416, 0
    %420 = vmatprep.subr.mxu0 0.0
    %421 = vmatpush1.msra.mxu0 0.0
    %422 = vmatprep.subr.mxu0 0.0
    %423 = vmatpush1.msra.mxu0 0.0
    %424 = vmatprep.subr.mxu0 0.0
    %425 = vmatpush1.msra.mxu0 0.0
    %426 = vmatprep.subr.mxu0 0.0
    %427 = vmatpush1.msra.mxu0 0.0
    %428 = vmatprep.subr.mxu0 0.0
    %429 = vmatpush1.msra.mxu0 0.0
    %430 = vmatprep.subr.mxu0 0.0
    %431 = vmatpush1.msra.mxu0 0.0
    %432 = vmatprep.subr.mxu0 0.0
    %433 = vmatpush1.msra.mxu0 0.0
    %434 = vmatprep.subr.mxu0 0.0
    %435 = vmatpush1.msra.mxu0 0.0
    %436 = vmatprep.subr.mxu0 0.0
    %437 = vmatpush1.msra.mxu0 0.0
    %438 = vmatprep.subr.mxu0 0.0
    %439 = vmatpush1.msra.mxu0 0.0
    %440 = vmatprep.subr.mxu0 0.0
    %441 = vmatpush1.msra.mxu0 0.0
    %442 = vmatprep.subr.mxu0 0.0
    %443 = vmatpush1.msra.mxu0 0.0
    %444 = vmatprep.subr.mxu0 0.0
    %445 = vmatpush1.msra.mxu0 0.0
    %446 = vmatprep.subr.mxu0 0.0
    %447 = vmatpush1.msra.mxu0 0.0
    %448 = vmatprep.subr.mxu0 0.0
    %449 = vmatpush1.msra.mxu0 0.0
    %450 = vmatprep.subr.mxu0 0.0
    %451 = vmatpush1.msra.mxu0 %v150
    %452 = vmatprep.subr.mxu0 0.0
    %453 = vmatpush2.msra.mxu0 0.0
    %454 = vmatprep.subr.mxu0 0.0
    %455 = vmatpush2.msra.mxu0 0.0
    %456 = vmatprep.subr.mxu0 0.0
    %457 = vmatpush2.msra.mxu0 0.0
    %458 = vmatprep.subr.mxu0 0.0
    %459 = vmatpush2.msra.mxu0 0.0
    %460 = vmatprep.subr.mxu0 0.0
    %461 = vmatpush2.msra.mxu0 0.0
    %462 = vmatprep.subr.mxu0 0.0
    %463 = vmatpush2.msra.mxu0 0.0
    %464 = vmatprep.subr.mxu0 0.0
    %465 = vmatpush2.msra.mxu0 0.0
    %466 = vmatprep.subr.mxu0 0.0
    %467 = vmatpush2.msra.mxu0 0.0
    %468 = vmatprep.subr.mxu0 0.0
    %469 = vmatpush2.msra.mxu0 0.0
    %470 = vmatprep.subr.mxu0 0.0
    %471 = vmatpush2.msra.mxu0 0.0
    %472 = vmatprep.subr.mxu0 0.0
    %473 = vmatpush2.msra.mxu0 0.0
    %474 = vmatprep.subr.mxu0 0.0
    %475 = vmatpush2.msra.mxu0 0.0
    %476 = vmatprep.subr.mxu0 0.0
    %477 = vmatpush2.msra.mxu0 0.0
    %478 = vmatprep.subr.mxu0 0.0
    %479 = vmatpush2.msra.mxu0 0.0
    %480 = vmatprep.subr.mxu0 0.0
    %481 = vmatpush2.msra.mxu0 0.0
    %482 = vmatprep.subr.mxu0 0.0
    %483 = vmatpush2.msra.mxu0 0.0
    %484 = vmatprep.mubr.f32.mxu0 0.0
    %485 = vmatmul.mubr.f32.gmra.mxu0 %v418
    %v486 = vpop.f32.mrf.mxu0
    %v487 = vadd.f32 %v151, %v486
    %v488 = vpop.f32.mrf.mxu0
    %489 = vdwg.mxu0
    %v490 = vlaneseq
    %v491 = vshrl.u32 %v490, 7
    %v492 = vsub.s32 0, %v491
    %v493 = vrot.slane %v487, %v492
    %v494 = vadd.f32 %v302, %v493
    %v495 = vadd.f32 %v303, %v493
    %v496 = vadd.f32 %v304, %v493
    %v497 = vsel %vm30, %v494, 0.0
    %498 = vadd.xlane.f32.xlu0 %v497
    %v499 = vpop.xlane.xlu0 %498
    %v500 = vsel %vm30, %v495, 0.0
    %501 = vadd.xlane.f32.xlu0 %v500
    %v502 = vpop.xlane.xlu0 %501
    %v503 = vsel %vm34, %v496, 0.0
    %504 = vadd.xlane.f32.xlu0 %v503
    %v505 = vpop.xlane.xlu0 %504
    %v506 = vmul.f32 %v499, %v242
    %v507 = vmul.f32 %v502, %v242
    %v508 = vmul.f32 %v505, %v242
    %v509 = vsub.f32 %v494, %v506
    %v510 = vsub.f32 %v495, %v507
    %v511 = vsub.f32 %v496, %v508
    %v512 = vmul.f32 %v509, %v509
    %v513 = vmul.f32 %v510, %v510
    %v514 = vmul.f32 %v511, %v511
    %v515 = vsel %vm30, %v512, 0.0
    %516 = vadd.xlane.f32.xlu0 %v515
    %v517 = vpop.xlane.xlu0 %516
    %v518 = vsel %vm30, %v513, 0.0
    %519 = vadd.xlane.f32.xlu0 %v518
    %v520 = vpop.xlane.xlu0 %519
    %v521 = vsel %vm34, %v514, 0.0
    %522 = vadd.xlane.f32.xlu0 %v521
    %v523 = vpop.xlane.xlu0 %522
    %v524 = vmul.f32 %v517, %v242
    %v525 = vmul.f32 %v520, %v242
    %v526 = vmul.f32 %v523, %v242
    %v527 = vadd.f32 %v524, 1e-05
    %v528 = vadd.f32 %v525, 1e-05
    %v529 = vadd.f32 %v526, 1e-05
    %v530 = vrsqrt.pop %v527
    %v531 = vrsqrt.pop %v528
    %v532 = vrsqrt.pop %v529
    %v533 = vmul.f32 %v509, %v530
    %v534 = vmul.f32 %v510, %v531
    %v535 = vmul.f32 %v511, %v532
    %v536 = vmul.f32 %v533, %v278
    %v537 = vmul.f32 %v534, %v278
    %v538 = vmul.f32 %v535, %v278
    %v539 = vadd.f32 %v536, %v288
    %v540 = vadd.f32 %v537, %v288
    %v541 = vadd.f32 %v538, %v288
    %v542 = vmul.f32 %v539, 2.0
    %v543 = vlaneseq
    %v544 = vshrl.u32 %v543, 7
    %v545 = vsub.s32 0, %v544
    %v546 = vrot.slane %v542, %v545
    %v547 = vadd.f32 %v539, %v546
    %v548 = vadd.f32 %v540, %v546
    %v549 = vadd.f32 %v541, %v546
    %s550 = scalar_lea.vmem %s0, 48
    %v551 = vld [vmem:[%s550] sm:$0xff]
    %v552 = vld [vmem:[%s550 + $0x8] sm:$0xff]
    %v553 = vld [vmem:[%s550 + $0x10] sm:$0x1]
    %v554 = vsel %vm30, %v551, 0.0
    %v555 = vsel %vm30, %v552, 0.0
    %v556 = vadd.f32 %v554, %v555
    %v557 = vsel %vm34, %v553, 0.0
    %v558 = vadd.f32 %v556, %v557
    %v559 = vrot.slane %v558, 4
    %v560 = vadd.f32 %v558, %v559
    %v561 = vrot.slane %v560, 2
    %v562 = vadd.f32 %v560, %v561
    %v563 = vrot.slane %v562, 1
    %v564 = vadd.f32 %v562, %v563
    %v565 = vmul.f32 %v564, %v43
    %v567 = vsel %vm30, %v565, 0
    %569 = vmatprep.subr.mxu0 0.0
    %570 = vmatpush1.msra.mxu0 0.0
    %571 = vmatprep.subr.mxu0 0.0
    %572 = vmatpush1.msra.mxu0 0.0
    %573 = vmatprep.subr.mxu0 0.0
    %574 = vmatpush1.msra.mxu0 0.0
    %575 = vmatprep.subr.mxu0 0.0
    %576 = vmatpush1.msra.mxu0 0.0
    %577 = vmatprep.subr.mxu0 0.0
    %578 = vmatpush1.msra.mxu0 0.0
    %579 = vmatprep.subr.mxu0 0.0
    %580 = vmatpush1.msra.mxu0 0.0
    %581 = vmatprep.subr.mxu0 0.0
    %582 = vmatpush1.msra.mxu0 0.0
    %583 = vmatprep.subr.mxu0 0.0
    %584 = vmatpush1.msra.mxu0 0.0
    %585 = vmatprep.subr.mxu0 0.0
    %586 = vmatpush1.msra.mxu0 0.0
    %587 = vmatprep.subr.mxu0 0.0
    %588 = vmatpush1.msra.mxu0 0.0
    %589 = vmatprep.subr.mxu0 0.0
    %590 = vmatpush1.msra.mxu0 0.0
    %591 = vmatprep.subr.mxu0 0.0
    %592 = vmatpush1.msra.mxu0 0.0
    %593 = vmatprep.subr.mxu0 0.0
    %594 = vmatpush1.msra.mxu0 %v48
    %595 = vmatprep.subr.mxu0 0.0
    %596 = vmatpush1.msra.mxu0 %v47
    %597 = vmatprep.subr.mxu0 0.0
    %598 = vmatpush1.msra.mxu0 %v46
    %599 = vmatprep.subr.mxu0 0.0
    %600 = vmatpush1.msra.mxu0 %v45
    %601 = vmatprep.subr.mxu0 0.0
    %602 = vmatpush2.msra.mxu0 0.0
    %603 = vmatprep.subr.mxu0 0.0
    %604 = vmatpush2.msra.mxu0 0.0
    %605 = vmatprep.subr.mxu0 0.0
    %606 = vmatpush2.msra.mxu0 0.0
    %607 = vmatprep.subr.mxu0 0.0
    %608 = vmatpush2.msra.mxu0 0.0
    %609 = vmatprep.subr.mxu0 0.0
    %610 = vmatpush2.msra.mxu0 0.0
    %611 = vmatprep.subr.mxu0 0.0
    %612 = vmatpush2.msra.mxu0 0.0
    %613 = vmatprep.subr.mxu0 0.0
    %614 = vmatpush2.msra.mxu0 0.0
    %615 = vmatprep.subr.mxu0 0.0
    %616 = vmatpush2.msra.mxu0 0.0
    %617 = vmatprep.subr.mxu0 0.0
    %618 = vmatpush2.msra.mxu0 0.0
    %619 = vmatprep.subr.mxu0 0.0
    %620 = vmatpush2.msra.mxu0 0.0
    %621 = vmatprep.subr.mxu0 0.0
    %622 = vmatpush2.msra.mxu0 0.0
    %623 = vmatprep.subr.mxu0 0.0
    %624 = vmatpush2.msra.mxu0 0.0
    %625 = vmatprep.subr.mxu0 0.0
    %626 = vmatpush2.msra.mxu0 0.0
    %627 = vmatprep.subr.mxu0 0.0
    %628 = vmatpush2.msra.mxu0 0.0
    %629 = vmatprep.subr.mxu0 0.0
    %630 = vmatpush2.msra.mxu0 0.0
    %631 = vmatprep.subr.mxu0 0.0
    %632 = vmatpush2.msra.mxu0 0.0
    %633 = vmatprep.mubr.f32.mxu0 0.0
    %634 = vmatmul.mubr.f32.gmra.mxu0 %v567
    %v635 = vpop.f32.mrf.mxu0
    %v636 = vadd.f32 %v49, %v635
    %v637 = vpop.f32.mrf.mxu0
    %638 = vdwg.mxu0
    %v639 = vmul.f32 %v636, 0.5
    %v640 = vmul.f32 %v636, 0.70710677
    %vm641 = vcmp.ge.f32.partialorder %v640, 0.0
    %v642 = vsel %vm641, 1.0, -1.0
    %v643 = vand.u32 2147483647, %v640
    %v644 = vmul.f32 %v643, 0.3275911
    %v645 = vadd.f32 %v644, 1.0
    %v646 = vrcp.pop %v645
    %v647 = vmul.f32 1.0, %v646
    %v648 = vmul.f32 %v647, 1.0614054
    %v649 = vadd.f32 %v648, -1.4531521
    %v650 = vmul.f32 %v649, %v647
    %v651 = vadd.f32 %v650, 1.4214138
    %v652 = vmul.f32 %v651, %v647
    %v653 = vadd.f32 %v652, -0.28449672
    %v654 = vmul.f32 %v653, %v647
    %v655 = vadd.f32 %v654, 0.2548296
    %v656 = vmul.f32 %v655, %v647
    %v657 = vsub.f32 0.0, %v643
    %v658 = vmul.f32 %v657, %v643
    %v659 = vmul.f32 %v658, 1.442695
    %v660 = vpow.pop %v659
    %v661 = vmul.f32 %v656, %v660
    %v662 = vsub.f32 1.0, %v661
    %v663 = vmul.f32 %v642, %v662
    %v664 = vadd.f32 %v663, 1.0
    %v665 = vmul.f32 %v639, %v664
    %v667 = vsel %vm152, %v665, 0
    %669 = vmatprep.subr.mxu0 0.0
    %670 = vmatpush1.msra.mxu0 0.0
    %671 = vmatprep.subr.mxu0 0.0
    %672 = vmatpush1.msra.mxu0 0.0
    %673 = vmatprep.subr.mxu0 0.0
    %674 = vmatpush1.msra.mxu0 0.0
    %675 = vmatprep.subr.mxu0 0.0
    %676 = vmatpush1.msra.mxu0 0.0
    %677 = vmatprep.subr.mxu0 0.0
    %678 = vmatpush1.msra.mxu0 0.0
    %679 = vmatprep.subr.mxu0 0.0
    %680 = vmatpush1.msra.mxu0 0.0
    %681 = vmatprep.subr.mxu0 0.0
    %682 = vmatpush1.msra.mxu0 0.0
    %683 = vmatprep.subr.mxu0 0.0
    %684 = vmatpush1.msra.mxu0 0.0
    %685 = vmatprep.subr.mxu0 0.0
    %686 = vmatpush1.msra.mxu0 0.0
    %687 = vmatprep.subr.mxu0 0.0
    %688 = vmatpush1.msra.mxu0 0.0
    %689 = vmatprep.subr.mxu0 0.0
    %690 = vmatpush1.msra.mxu0 0.0
    %691 = vmatprep.subr.mxu0 0.0
    %692 = vmatpush1.msra.mxu0 0.0
    %693 = vmatprep.subr.mxu0 0.0
    %694 = vmatpush1.msra.mxu0 0.0
    %695 = vmatprep.subr.mxu0 0.0
    %696 = vmatpush1.msra.mxu0 0.0
    %697 = vmatprep.subr.mxu0 0.0
    %698 = vmatpush1.msra.mxu0 0.0
    %699 = vmatprep.subr.mxu0 0.0
    %700 = vmatpush1.msra.mxu0 %v150
    %701 = vmatprep.subr.mxu0 0.0
    %702 = vmatpush2.msra.mxu0 0.0
    %703 = vmatprep.subr.mxu0 0.0
    %704 = vmatpush2.msra.mxu0 0.0
    %705 = vmatprep.subr.mxu0 0.0
    %706 = vmatpush2.msra.mxu0 0.0
    %707 = vmatprep.subr.mxu0 0.0
    %708 = vmatpush2.msra.mxu0 0.0
    %709 = vmatprep.subr.mxu0 0.0
    %710 = vmatpush2.msra.mxu0 0.0
    %711 = vmatprep.subr.mxu0 0.0
    %712 = vmatpush2.msra.mxu0 0.0
    %713 = vmatprep.subr.mxu0 0.0
    %714 = vmatpush2.msra.mxu0 0.0
    %715 = vmatprep.subr.mxu0 0.0
    %716 = vmatpush2.msra.mxu0 0.0
    %717 = vmatprep.subr.mxu0 0.0
    %718 = vmatpush2.msra.mxu0 0.0
    %719 = vmatprep.subr.mxu0 0.0
    %720 = vmatpush2.msra.mxu0 0.0
    %721 = vmatprep.subr.mxu0 0.0
    %722 = vmatpush2.msra.mxu0 0.0
    %723 = vmatprep.subr.mxu0 0.0
    %724 = vmatpush2.msra.mxu0 0.0
    %725 = vmatprep.subr.mxu0 0.0
    %726 = vmatpush2.msra.mxu0 0.0
    %727 = vmatprep.subr.mxu0 0.0
    %728 = vmatpush2.msra.mxu0 0.0
    %729 = vmatprep.subr.mxu0 0.0
    %730 = vmatpush2.msra.mxu0 0.0
    %731 = vmatprep.subr.mxu0 0.0
    %732 = vmatpush2.msra.mxu0 0.0
    %733 = vmatprep.mubr.f32.mxu0 0.0
    %734 = vmatmul.mubr.f32.gmra.mxu0 %v667
    %v735 = vpop.f32.mrf.mxu0
    %v736 = vadd.f32 %v151, %v735
    %v737 = vpop.f32.mrf.mxu0
    %738 = vdwg.mxu0
    %v739 = vlaneseq
    %v740 = vshrl.u32 %v739, 7
    %v741 = vsub.s32 0, %v740
    %v742 = vrot.slane %v736, %v741
    %v743 = vadd.f32 %v551, %v742
    %v744 = vadd.f32 %v552, %v742
    %v745 = vadd.f32 %v553, %v742
    %v746 = vsel %vm30, %v743, 0.0
    %747 = vadd.xlane.f32.xlu0 %v746
    %v748 = vpop.xlane.xlu0 %747
    %v749 = vsel %vm30, %v744, 0.0
    %750 = vadd.xlane.f32.xlu0 %v749
    %v751 = vpop.xlane.xlu0 %750
    %v752 = vsel %vm34, %v745, 0.0
    %753 = vadd.xlane.f32.xlu0 %v752
    %v754 = vpop.xlane.xlu0 %753
    %v755 = vmul.f32 %v748, %v242
    %v756 = vmul.f32 %v751, %v242
    %v757 = vmul.f32 %v754, %v242
    %v758 = vsub.f32 %v743, %v755
    %v759 = vsub.f32 %v744, %v756
    %v760 = vsub.f32 %v745, %v757
    %v761 = vmul.f32 %v758, %v758
    %v762 = vmul.f32 %v759, %v759
    %v763 = vmul.f32 %v760, %v760
    %v764 = vsel %vm30, %v761, 0.0
    %765 = vadd.xlane.f32.xlu0 %v764
    %v766 = vpop.xlane.xlu0 %765
    %v767 = vsel %vm30, %v762, 0.0
    %768 = vadd.xlane.f32.xlu0 %v767
    %v769 = vpop.xlane.xlu0 %768
    %v770 = vsel %vm34, %v763, 0.0
    %771 = vadd.xlane.f32.xlu0 %v770
    %v772 = vpop.xlane.xlu0 %771
    %v773 = vmul.f32 %v766, %v242
    %v774 = vmul.f32 %v769, %v242
    %v775 = vmul.f32 %v772, %v242
    %v776 = vadd.f32 %v773, 1e-05
    %v777 = vadd.f32 %v774, 1e-05
    %v778 = vadd.f32 %v775, 1e-05
    %v779 = vrsqrt.pop %v776
    %v780 = vrsqrt.pop %v777
    %v781 = vrsqrt.pop %v778
    %v782 = vmul.f32 %v758, %v779
    %v783 = vmul.f32 %v759, %v780
    %v784 = vmul.f32 %v760, %v781
    %v785 = vmul.f32 %v782, %v278
    %v786 = vmul.f32 %v783, %v278
    %v787 = vmul.f32 %v784, %v278
    %v788 = vadd.f32 %v785, %v288
    %v789 = vadd.f32 %v786, %v288
    %v790 = vadd.f32 %v787, %v288
    %v791 = vmul.f32 %v788, 2.0
    %v792 = vlaneseq
    %v793 = vshrl.u32 %v792, 7
    %v794 = vsub.s32 0, %v793
    %v795 = vrot.slane %v791, %v794
    %v796 = vadd.f32 %v788, %v795
    %v797 = vadd.f32 %v789, %v795
    %v798 = vadd.f32 %v790, %v795
    %s799 = scalar_lea.vmem %s0, 72
    %v800 = vld [vmem:[%s799] sm:$0xff]
    %v801 = vld [vmem:[%s799 + $0x8] sm:$0xff]
    %v802 = vld [vmem:[%s799 + $0x10] sm:$0x1]
    %v803 = vsel %vm30, %v800, 0.0
    %v804 = vsel %vm30, %v801, 0.0
    %v805 = vadd.f32 %v803, %v804
    %v806 = vsel %vm34, %v802, 0.0
    %v807 = vadd.f32 %v805, %v806
    %v808 = vrot.slane %v807, 4
    %v809 = vadd.f32 %v807, %v808
    %v810 = vrot.slane %v809, 2
    %v811 = vadd.f32 %v809, %v810
    %v812 = vrot.slane %v811, 1
    %v813 = vadd.f32 %v811, %v812
    %v814 = vmul.f32 %v813, %v43
    %v816 = vsel %vm30, %v814, 0
    %818 = vmatprep.subr.mxu0 0.0
    %819 = vmatpush1.msra.mxu0 0.0
    %820 = vmatprep.subr.mxu0 0.0
    %821 = vmatpush1.msra.mxu0 0.0
    %822 = vmatprep.subr.mxu0 0.0
    %823 = vmatpush1.msra.mxu0 0.0
    %824 = vmatprep.subr.mxu0 0.0
    %825 = vmatpush1.msra.mxu0 0.0
    %826 = vmatprep.subr.mxu0 0.0
    %827 = vmatpush1.msra.mxu0 0.0
    %828 = vmatprep.subr.mxu0 0.0
    %829 = vmatpush1.msra.mxu0 0.0
    %830 = vmatprep.subr.mxu0 0.0
    %831 = vmatpush1.msra.mxu0 0.0
    %832 = vmatprep.subr.mxu0 0.0
    %833 = vmatpush1.msra.mxu0 0.0
    %834 = vmatprep.subr.mxu0 0.0
    %835 = vmatpush1.msra.mxu0 0.0
    %836 = vmatprep.subr.mxu0 0.0
    %837 = vmatpush1.msra.mxu0 0.0
    %838 = vmatprep.subr.mxu0 0.0
    %839 = vmatpush1.msra.mxu0 0.0
    %840 = vmatprep.subr.mxu0 0.0
    %841 = vmatpush1.msra.mxu0 0.0
    %842 = vmatprep.subr.mxu0 0.0
    %843 = vmatpush1.msra.mxu0 %v48
    %844 = vmatprep.subr.mxu0 0.0
    %845 = vmatpush1.msra.mxu0 %v47
    %846 = vmatprep.subr.mxu0 0.0
    %847 = vmatpush1.msra.mxu0 %v46
    %848 = vmatprep.subr.mxu0 0.0
    %849 = vmatpush1.msra.mxu0 %v45
    %850 = vmatprep.subr.mxu0 0.0
    %851 = vmatpush2.msra.mxu0 0.0
    %852 = vmatprep.subr.mxu0 0.0
    %853 = vmatpush2.msra.mxu0 0.0
    %854 = vmatprep.subr.mxu0 0.0
    %855 = vmatpush2.msra.mxu0 0.0
    %856 = vmatprep.subr.mxu0 0.0
    %857 = vmatpush2.msra.mxu0 0.0
    %858 = vmatprep.subr.mxu0 0.0
    %859 = vmatpush2.msra.mxu0 0.0
    %860 = vmatprep.subr.mxu0 0.0
    %861 = vmatpush2.msra.mxu0 0.0
    %862 = vmatprep.subr.mxu0 0.0
    %863 = vmatpush2.msra.mxu0 0.0
    %864 = vmatprep.subr.mxu0 0.0
    %865 = vmatpush2.msra.mxu0 0.0
    %866 = vmatprep.subr.mxu0 0.0
    %867 = vmatpush2.msra.mxu0 0.0
    %868 = vmatprep.subr.mxu0 0.0
    %869 = vmatpush2.msra.mxu0 0.0
    %870 = vmatprep.subr.mxu0 0.0
    %871 = vmatpush2.msra.mxu0 0.0
    %872 = vmatprep.subr.mxu0 0.0
    %873 = vmatpush2.msra.mxu0 0.0
    %874 = vmatprep.subr.mxu0 0.0
    %875 = vmatpush2.msra.mxu0 0.0
    %876 = vmatprep.subr.mxu0 0.0
    %877 = vmatpush2.msra.mxu0 0.0
    %878 = vmatprep.subr.mxu0 0.0
    %879 = vmatpush2.msra.mxu0 0.0
    %880 = vmatprep.subr.mxu0 0.0
    %881 = vmatpush2.msra.mxu0 0.0
    %882 = vmatprep.mubr.f32.mxu0 0.0
    %883 = vmatmul.mubr.f32.gmra.mxu0 %v816
    %v884 = vpop.f32.mrf.mxu0
    %v885 = vadd.f32 %v49, %v884
    %v886 = vpop.f32.mrf.mxu0
    %887 = vdwg.mxu0
    %v888 = vmul.f32 %v885, 0.5
    %v889 = vmul.f32 %v885, 0.70710677
    %vm890 = vcmp.ge.f32.partialorder %v889, 0.0
    %v891 = vsel %vm890, 1.0, -1.0
    %v892 = vand.u32 2147483647, %v889
    %v893 = vmul.f32 %v892, 0.3275911
    %v894 = vadd.f32 %v893, 1.0
    %v895 = vrcp.pop %v894
    %v896 = vmul.f32 1.0, %v895
    %v897 = vmul.f32 %v896, 1.0614054
    %v898 = vadd.f32 %v897, -1.4531521
    %v899 = vmul.f32 %v898, %v896
    %v900 = vadd.f32 %v899, 1.4214138
    %v901 = vmul.f32 %v900, %v896
    %v902 = vadd.f32 %v901, -0.28449672
    %v903 = vmul.f32 %v902, %v896
    %v904 = vadd.f32 %v903, 0.2548296
    %v905 = vmul.f32 %v904, %v896
    %v906 = vsub.f32 0.0, %v892
    %v907 = vmul.f32 %v906, %v892
    %v908 = vmul.f32 %v907, 1.442695
    %v909 = vpow.pop %v908
    %v910 = vmul.f32 %v905, %v909
    %v911 = vsub.f32 1.0, %v910
    %v912 = vmul.f32 %v891, %v911
    %v913 = vadd.f32 %v912, 1.0
    %v914 = vmul.f32 %v888, %v913
    %v916 = vsel %vm152, %v914, 0
    %918 = vmatprep.subr.mxu0 0.0
    %919 = vmatpush1.msra.mxu0 0.0
    %920 = vmatprep.subr.mxu0 0.0
    %921 = vmatpush1.msra.mxu0 0.0
    %922 = vmatprep.subr.mxu0 0.0
    %923 = vmatpush1.msra.mxu0 0.0
    %924 = vmatprep.subr.mxu0 0.0
    %925 = vmatpush1.msra.mxu0 0.0
    %926 = vmatprep.subr.mxu0 0.0
    %927 = vmatpush1.msra.mxu0 0.0
    %928 = vmatprep.subr.mxu0 0.0
    %929 = vmatpush1.msra.mxu0 0.0
    %930 = vmatprep.subr.mxu0 0.0
    %931 = vmatpush1.msra.mxu0 0.0
    %932 = vmatprep.subr.mxu0 0.0
    %933 = vmatpush1.msra.mxu0 0.0
    %934 = vmatprep.subr.mxu0 0.0
    %935 = vmatpush1.msra.mxu0 0.0
    %936 = vmatprep.subr.mxu0 0.0
    %937 = vmatpush1.msra.mxu0 0.0
    %938 = vmatprep.subr.mxu0 0.0
    %939 = vmatpush1.msra.mxu0 0.0
    %940 = vmatprep.subr.mxu0 0.0
    %941 = vmatpush1.msra.mxu0 0.0
    %942 = vmatprep.subr.mxu0 0.0
    %943 = vmatpush1.msra.mxu0 0.0
    %944 = vmatprep.subr.mxu0 0.0
    %945 = vmatpush1.msra.mxu0 0.0
    %946 = vmatprep.subr.mxu0 0.0
    %947 = vmatpush1.msra.mxu0 0.0
    %948 = vmatprep.subr.mxu0 0.0
    %949 = vmatpush1.msra.mxu0 %v150
    %950 = vmatprep.subr.mxu0 0.0
    %951 = vmatpush2.msra.mxu0 0.0
    %952 = vmatprep.subr.mxu0 0.0
    %953 = vmatpush2.msra.mxu0 0.0
    %954 = vmatprep.subr.mxu0 0.0
    %955 = vmatpush2.msra.mxu0 0.0
    %956 = vmatprep.subr.mxu0 0.0
    %957 = vmatpush2.msra.mxu0 0.0
    %958 = vmatprep.subr.mxu0 0.0
    %959 = vmatpush2.msra.mxu0 0.0
    %960 = vmatprep.subr.mxu0 0.0
    %961 = vmatpush2.msra.mxu0 0.0
    %962 = vmatprep.subr.mxu0 0.0
    %963 = vmatpush2.msra.mxu0 0.0
    %964 = vmatprep.subr.mxu0 0.0
    %965 = vmatpush2.msra.mxu0 0.0
    %966 = vmatprep.subr.mxu0 0.0
    %967 = vmatpush2.msra.mxu0 0.0
    %968 = vmatprep.subr.mxu0 0.0
    %969 = vmatpush2.msra.mxu0 0.0
    %970 = vmatprep.subr.mxu0 0.0
    %971 = vmatpush2.msra.mxu0 0.0
    %972 = vmatprep.subr.mxu0 0.0
    %973 = vmatpush2.msra.mxu0 0.0
    %974 = vmatprep.subr.mxu0 0.0
    %975 = vmatpush2.msra.mxu0 0.0
    %976 = vmatprep.subr.mxu0 0.0
    %977 = vmatpush2.msra.mxu0 0.0
    %978 = vmatprep.subr.mxu0 0.0
    %979 = vmatpush2.msra.mxu0 0.0
    %980 = vmatprep.subr.mxu0 0.0
    %981 = vmatpush2.msra.mxu0 0.0
    %982 = vmatprep.mubr.f32.mxu0 0.0
    %983 = vmatmul.mubr.f32.gmra.mxu0 %v916
    %v984 = vpop.f32.mrf.mxu0
    %v985 = vadd.f32 %v151, %v984
    %v986 = vpop.f32.mrf.mxu0
    %987 = vdwg.mxu0
    %v988 = vlaneseq
    %v989 = vshrl.u32 %v988, 7
    %v990 = vsub.s32 0, %v989
    %v991 = vrot.slane %v985, %v990
    %v992 = vadd.f32 %v800, %v991
    %v993 = vadd.f32 %v801, %v991
    %v994 = vadd.f32 %v802, %v991
    %v995 = vsel %vm30, %v992, 0.0
    %996 = vadd.xlane.f32.xlu0 %v995
    %v997 = vpop.xlane.xlu0 %996
    %v998 = vsel %vm30, %v993, 0.0
    %999 = vadd.xlane.f32.xlu0 %v998
    %v1000 = vpop.xlane.xlu0 %999
    %v1001 = vsel %vm34, %v994, 0.0
    %1002 = vadd.xlane.f32.xlu0 %v1001
    %v1003 = vpop.xlane.xlu0 %1002
    %v1004 = vmul.f32 %v997, %v242
    %v1005 = vmul.f32 %v1000, %v242
    %v1006 = vmul.f32 %v1003, %v242
    %v1007 = vsub.f32 %v992, %v1004
    %v1008 = vsub.f32 %v993, %v1005
    %v1009 = vsub.f32 %v994, %v1006
    %v1010 = vmul.f32 %v1007, %v1007
    %v1011 = vmul.f32 %v1008, %v1008
    %v1012 = vmul.f32 %v1009, %v1009
    %v1013 = vsel %vm30, %v1010, 0.0
    %1014 = vadd.xlane.f32.xlu0 %v1013
    %v1015 = vpop.xlane.xlu0 %1014
    %v1016 = vsel %vm30, %v1011, 0.0
    %1017 = vadd.xlane.f32.xlu0 %v1016
    %v1018 = vpop.xlane.xlu0 %1017
    %v1019 = vsel %vm34, %v1012, 0.0
    %1020 = vadd.xlane.f32.xlu0 %v1019
    %v1021 = vpop.xlane.xlu0 %1020
    %v1022 = vmul.f32 %v1015, %v242
    %v1023 = vmul.f32 %v1018, %v242
    %v1024 = vmul.f32 %v1021, %v242
    %v1025 = vadd.f32 %v1022, 1e-05
    %v1026 = vadd.f32 %v1023, 1e-05
    %v1027 = vadd.f32 %v1024, 1e-05
    %v1028 = vrsqrt.pop %v1025
    %v1029 = vrsqrt.pop %v1026
    %v1030 = vrsqrt.pop %v1027
    %v1031 = vmul.f32 %v1007, %v1028
    %v1032 = vmul.f32 %v1008, %v1029
    %v1033 = vmul.f32 %v1009, %v1030
    %v1034 = vmul.f32 %v1031, %v278
    %v1035 = vmul.f32 %v1032, %v278
    %v1036 = vmul.f32 %v1033, %v278
    %v1037 = vadd.f32 %v1034, %v288
    %v1038 = vadd.f32 %v1035, %v288
    %v1039 = vadd.f32 %v1036, %v288
    %v1040 = vmul.f32 %v1037, 2.0
    %v1041 = vlaneseq
    %v1042 = vshrl.u32 %v1041, 7
    %v1043 = vsub.s32 0, %v1042
    %v1044 = vrot.slane %v1040, %v1043
    %v1045 = vadd.f32 %v1037, %v1044
    %v1046 = vadd.f32 %v1038, %v1044
    %v1047 = vadd.f32 %v1039, %v1044
    %v1048 = vmul.f32 %v298, %v298
    %v1049 = vmul.f32 %v299, %v299
    %v1050 = vmul.f32 %v300, %v300
    %vm1051 = vcmask 261121
    %v1052 = vsel %vm1051, %v1048, 0.0
    %1053 = vadd.xlane.f32.xlu0 %v1052
    %v1054 = vpop.xlane.xlu0 %1053
    %v1055 = vsel %vm30, %v1049, 0.0
    %1056 = vadd.xlane.f32.xlu0 %v1055
    %v1057 = vpop.xlane.xlu0 %1056
    %v1058 = vsel %vm34, %v1050, 0.0
    %1059 = vadd.xlane.f32.xlu0 %v1058
    %v1060 = vpop.xlane.xlu0 %1059
    %v1061 = vrsqrt.pop %v1054
    %v1062 = vmul.f32 %v1054, %v1061
    %vm1063 = vcmp.eq.f32.partialorder %v1054, inf
    %v1064 = vsel %vm1063, %v1054, %v1062
    %vm1065 = vcmp.eq.f32.partialorder %v1054, 0.0
    %v1066 = vand.u32 %v1054, 2147483648
    %v1067 = vsel %vm1065, %v1066, %v1064
    %v1068 = vrsqrt.pop %v1057
    %v1069 = vmul.f32 %v1057, %v1068
    %vm1070 = vcmp.eq.f32.partialorder %v1057, inf
    %v1071 = vsel %vm1070, %v1057, %v1069
    %vm1072 = vcmp.eq.f32.partialorder %v1057, 0.0
    %v1073 = vand.u32 %v1057, 2147483648
    %v1074 = vsel %vm1072, %v1073, %v1071
    %v1075 = vrsqrt.pop %v1060
    %v1076 = vmul.f32 %v1060, %v1075
    %vm1077 = vcmp.eq.f32.partialorder %v1060, inf
    %v1078 = vsel %vm1077, %v1060, %v1076
    %vm1079 = vcmp.eq.f32.partialorder %v1060, 0.0
    %v1080 = vand.u32 %v1060, 2147483648
    %v1081 = vsel %vm1079, %v1080, %v1078
    %v1082 = vmax.f32 %v1067, 1e-12
    %v1083 = vmax.f32 %v1074, 1e-12
    %v1084 = vmax.f32 %v1081, 1e-12
    %v1085 = vrcp.pop %v1082
    %v1086 = vmul.f32 %v298, %v1085
    %v1087 = vrcp.pop %v1083
    %v1088 = vmul.f32 %v299, %v1087
    %v1089 = vrcp.pop %v1084
    %v1090 = vmul.f32 %v300, %v1089
    %v1091 = vsel %vm1051, %v1086, 0.0
    %1092 = vadd.xlane.f32.xlu0 %v1091
    %v1093 = vpop.xlane.xlu0 %1092
    %v1094 = vsel %vm30, %v1088, 0.0
    %1095 = vadd.xlane.f32.xlu0 %v1094
    %v1096 = vpop.xlane.xlu0 %1095
    %v1097 = vsel %vm34, %v1090, 0.0
    %1098 = vadd.xlane.f32.xlu0 %v1097
    %v1099 = vpop.xlane.xlu0 %1098
    %v1100 = vmul.f32 %v1093, %v242
    %v1101 = vmul.f32 %v1096, %v242
    %v1102 = vmul.f32 %v1099, %v242
    %v1103 = vsub.f32 %v1086, %v1100
    %v1104 = vsub.f32 %v1088, %v1101
    %v1105 = vsub.f32 %v1090, %v1102
    %1106 = vst.msk [vmem:[#allocation2 - $0x1] sm:$0xfe] %vm1051, %v1103
    %1107 = vst.msk [vmem:[#allocation2 + $0x7] sm:$0xff] %vm30, %v1104
    %1108 = vst.msk [vmem:[#allocation2 + $0xf] sm:$0x1] %vm34, %v1105
    %v1109 = vmul.f32 %v547, %v547
    %v1110 = vmul.f32 %v548, %v548
    %v1111 = vmul.f32 %v549, %v549
    %v1112 = vsel %vm1051, %v1109, 0.0
    %1113 = vadd.xlane.f32.xlu0 %v1112
    %v1114 = vpop.xlane.xlu0 %1113
    %v1115 = vsel %vm30, %v1110, 0.0
    %1116 = vadd.xlane.f32.xlu0 %v1115
    %v1117 = vpop.xlane.xlu0 %1116
    %v1118 = vsel %vm34, %v1111, 0.0
    %1119 = vadd.xlane.f32.xlu0 %v1118
    %v1120 = vpop.xlane.xlu0 %1119
    %v1121 = vrsqrt.pop %v1114
    %v1122 = vmul.f32 %v1114, %v1121
    %vm1123 = vcmp.eq.f32.partialorder %v1114, inf
    %v1124 = vsel %vm1123, %v1114, %v1122
    %vm1125 = vcmp.eq.f32.partialorder %v1114, 0.0
    %v1126 = vand.u32 %v1114, 2147483648
    %v1127 = vsel %vm1125, %v1126, %v1124
    %v1128 = vrsqrt.pop %v1117
    %v1129 = vmul.f32 %v1117, %v1128
    %vm1130 = vcmp.eq.f32.partialorder %v1117, inf
    %v1131 = vsel %vm1130, %v1117, %v1129
    %vm1132 = vcmp.eq.f32.partialorder %v1117, 0.0
    %v1133 = vand.u32 %v1117, 2147483648
    %v1134 = vsel %vm1132, %v1133, %v1131
    %v1135 = vrsqrt.pop %v1120
    %v1136 = vmul.f32 %v1120, %v1135
    %vm1137 = vcmp.eq.f32.partialorder %v1120, inf
    %v1138 = vsel %vm1137, %v1120, %v1136
    %vm1139 = vcmp.eq.f32.partialorder %v1120, 0.0
    %v1140 = vand.u32 %v1120, 2147483648
    %v1141 = vsel %vm1139, %v1140, %v1138
    %v1142 = vmax.f32 %v1127, 1e-12
    %v1143 = vmax.f32 %v1134, 1e-12
    %v1144 = vmax.f32 %v1141, 1e-12
    %v1145 = vrcp.pop %v1142
    %v1146 = vmul.f32 %v547, %v1145
    %v1147 = vrcp.pop %v1143
    %v1148 = vmul.f32 %v548, %v1147
    %v1149 = vrcp.pop %v1144
    %v1150 = vmul.f32 %v549, %v1149
    %v1151 = vsel %vm1051, %v1146, 0.0
    %1152 = vadd.xlane.f32.xlu0 %v1151
    %v1153 = vpop.xlane.xlu0 %1152
    %v1154 = vsel %vm30, %v1148, 0.0
    %1155 = vadd.xlane.f32.xlu0 %v1154
    %v1156 = vpop.xlane.xlu0 %1155
    %v1157 = vsel %vm34, %v1150, 0.0
    %1158 = vadd.xlane.f32.xlu0 %v1157
    %v1159 = vpop.xlane.xlu0 %1158
    %v1160 = vmul.f32 %v1153, %v242
    %v1161 = vmul.f32 %v1156, %v242
    %v1162 = vmul.f32 %v1159, %v242
    %v1163 = vsub.f32 %v1146, %v1160
    %v1164 = vsub.f32 %v1148, %v1161
    %v1165 = vsub.f32 %v1150, %v1162
    %s1166 = scalar_lea.vmem [#allocation2], 16
    %1167 = vst.msk [vmem:[%s1166 - $0x1] sm:$0xfe] %vm1051, %v1163
    %1168 = vst.msk [vmem:[%s1166 + $0x7] sm:$0xff] %vm30, %v1164
    %1169 = vst.msk [vmem:[%s1166 + $0xf] sm:$0x1] %vm34, %v1165
    %v1170 = vmul.f32 %v796, %v796
    %v1171 = vmul.f32 %v797, %v797
    %v1172 = vmul.f32 %v798, %v798
    %v1173 = vsel %vm1051, %v1170, 0.0
    %1174 = vadd.xlane.f32.xlu0 %v1173
    %v1175 = vpop.xlane.xlu0 %1174
    %v1176 = vsel %vm30, %v1171, 0.0
    %1177 = vadd.xlane.f32.xlu0 %v1176
    %v1178 = vpop.xlane.xlu0 %1177
    %v1179 = vsel %vm34, %v1172, 0.0
    %1180 = vadd.xlane.f32.xlu0 %v1179
    %v1181 = vpop.xlane.xlu0 %1180
    %v1182 = vrsqrt.pop %v1175
    %v1183 = vmul.f32 %v1175, %v1182
    %vm1184 = vcmp.eq.f32.partialorder %v1175, inf
    %v1185 = vsel %vm1184, %v1175, %v1183
    %vm1186 = vcmp.eq.f32.partialorder %v1175, 0.0
    %v1187 = vand.u32 %v1175, 2147483648
    %v1188 = vsel %vm1186, %v1187, %v1185
    %v1189 = vrsqrt.pop %v1178
    %v1190 = vmul.f32 %v1178, %v1189
    %vm1191 = vcmp.eq.f32.partialorder %v1178, inf
    %v1192 = vsel %vm1191, %v1178, %v1190
    %vm1193 = vcmp.eq.f32.partialorder %v1178, 0.0
    %v1194 = vand.u32 %v1178, 2147483648
    %v1195 = vsel %vm1193, %v1194, %v1192
    %v1196 = vrsqrt.pop %v1181
    %v1197 = vmul.f32 %v1181, %v1196
    %vm1198 = vcmp.eq.f32.partialorder %v1181, inf
    %v1199 = vsel %vm1198, %v1181, %v1197
    %vm1200 = vcmp.eq.f32.partialorder %v1181, 0.0
    %v1201 = vand.u32 %v1181, 2147483648
    %v1202 = vsel %vm1200, %v1201, %v1199
    %v1203 = vmax.f32 %v1188, 1e-12
    %v1204 = vmax.f32 %v1195, 1e-12
    %v1205 = vmax.f32 %v1202, 1e-12
    %v1206 = vrcp.pop %v1203
    %v1207 = vmul.f32 %v796, %v1206
    %v1208 = vrcp.pop %v1204
    %v1209 = vmul.f32 %v797, %v1208
    %v1210 = vrcp.pop %v1205
    %v1211 = vmul.f32 %v798, %v1210
    %v1212 = vsel %vm1051, %v1207, 0.0
    %1213 = vadd.xlane.f32.xlu0 %v1212
    %v1214 = vpop.xlane.xlu0 %1213
    %v1215 = vsel %vm30, %v1209, 0.0
    %1216 = vadd.xlane.f32.xlu0 %v1215
    %v1217 = vpop.xlane.xlu0 %1216
    %v1218 = vsel %vm34, %v1211, 0.0
    %1219 = vadd.xlane.f32.xlu0 %v1218
    %v1220 = vpop.xlane.xlu0 %1219
    %v1221 = vmul.f32 %v1214, %v242
    %v1222 = vmul.f32 %v1217, %v242
    %v1223 = vmul.f32 %v1220, %v242
    %v1224 = vsub.f32 %v1207, %v1221
    %v1225 = vsub.f32 %v1209, %v1222
    %v1226 = vsub.f32 %v1211, %v1223
    %s1227 = scalar_lea.vmem [#allocation2], 32
    %1228 = vst.msk [vmem:[%s1227 - $0x1] sm:$0xfe] %vm1051, %v1224
    %1229 = vst.msk [vmem:[%s1227 + $0x7] sm:$0xff] %vm30, %v1225
    %1230 = vst.msk [vmem:[%s1227 + $0xf] sm:$0x1] %vm34, %v1226
    %v1231 = vmul.f32 %v1045, %v1045
    %v1232 = vmul.f32 %v1046, %v1046
    %v1233 = vmul.f32 %v1047, %v1047
    %v1234 = vsel %vm1051, %v1231, 0.0
    %1235 = vadd.xlane.f32.xlu0 %v1234
    %v1236 = vpop.xlane.xlu0 %1235
    %v1237 = vsel %vm30, %v1232, 0.0
    %1238 = vadd.xlane.f32.xlu0 %v1237
    %v1239 = vpop.xlane.xlu0 %1238
    %v1240 = vsel %vm34, %v1233, 0.0
    %1241 = vadd.xlane.f32.xlu0 %v1240
    %v1242 = vpop.xlane.xlu0 %1241
    %v1243 = vrsqrt.pop %v1236
    %v1244 = vmul.f32 %v1236, %v1243
    %vm1245 = vcmp.eq.f32.partialorder %v1236, inf
    %v1246 = vsel %vm1245, %v1236, %v1244
    %vm1247 = vcmp.eq.f32.partialorder %v1236, 0.0
    %v1248 = vand.u32 %v1236, 2147483648
    %v1249 = vsel %vm1247, %v1248, %v1246
    %v1250 = vrsqrt.pop %v1239
    %v1251 = vmul.f32 %v1239, %v1250
    %vm1252 = vcmp.eq.f32.partialorder %v1239, inf
    %v1253 = vsel %vm1252, %v1239, %v1251
    %vm1254 = vcmp.eq.f32.partialorder %v1239, 0.0
    %v1255 = vand.u32 %v1239, 2147483648
    %v1256 = vsel %vm1254, %v1255, %v1253
    %v1257 = vrsqrt.pop %v1242
    %v1258 = vmul.f32 %v1242, %v1257
    %vm1259 = vcmp.eq.f32.partialorder %v1242, inf
    %v1260 = vsel %vm1259, %v1242, %v1258
    %vm1261 = vcmp.eq.f32.partialorder %v1242, 0.0
    %v1262 = vand.u32 %v1242, 2147483648
    %v1263 = vsel %vm1261, %v1262, %v1260
    %v1264 = vmax.f32 %v1249, 1e-12
    %v1265 = vmax.f32 %v1256, 1e-12
    %v1266 = vmax.f32 %v1263, 1e-12
    %v1267 = vrcp.pop %v1264
    %v1268 = vmul.f32 %v1045, %v1267
    %v1269 = vrcp.pop %v1265
    %v1270 = vmul.f32 %v1046, %v1269
    %v1271 = vrcp.pop %v1266
    %v1272 = vmul.f32 %v1047, %v1271
    %v1273 = vsel %vm1051, %v1268, 0.0
    %1274 = vadd.xlane.f32.xlu0 %v1273
    %v1275 = vpop.xlane.xlu0 %1274
    %v1276 = vsel %vm30, %v1270, 0.0
    %1277 = vadd.xlane.f32.xlu0 %v1276
    %v1278 = vpop.xlane.xlu0 %1277
    %v1279 = vsel %vm34, %v1272, 0.0
    %1280 = vadd.xlane.f32.xlu0 %v1279
    %v1281 = vpop.xlane.xlu0 %1280
    %v1282 = vmul.f32 %v1275, %v242
    %v1283 = vmul.f32 %v1278, %v242
    %v1284 = vmul.f32 %v1281, %v242
    %v1285 = vsub.f32 %v1268, %v1282
    %v1286 = vsub.f32 %v1270, %v1283
    %v1287 = vsub.f32 %v1272, %v1284
    %s1288 = scalar_lea.vmem [#allocation2], 48
    %1289 = vst.msk [vmem:[%s1288 - $0x1] sm:$0xfe] %vm1051, %v1285
    %1290 = vst.msk [vmem:[%s1288 + $0x7] sm:$0xff] %vm30, %v1286
    %1291 = vst.msk [vmem:[%s1288 + $0xf] sm:$0x1] %vm34, %v1287
    // Predicated region
    $region30: #{tpu_custom_call.1} parent=1 // pred_check
      _
    $region31: #{tpu_custom_call.1} parent=1 // pred_check_branch
      %1293 = sbr.rel (0) target = $region33
    $region32: #{tpu_custom_call.1} parent=1 // pred_region
      %s1295 = ssub.s32 1024, 1024
      %1296 = vsyncadd [#allocation3], %s1295
      %s1297 = sshll.u32 [#allocation2], 4
      %s1298 = int_to_ptr.vmem [resolvable:$true] %s1297
      %1303 = dma.vmem_to_hbm [thread:$0]  %s1298, 1024, %s7, [#allocation3], 128, 128, 8
    $region33: #{tpu_custom_call.1} parent=1 // pred_fallthru
      _
    // Predicated region
    $region34: #{tpu_custom_call.1} parent=1 // pred_check
      _
    $region35: #{tpu_custom_call.1} parent=1 // pred_check_branch
      %1305 = sbr.rel (0) target = $region37
    $region36: #{tpu_custom_call.1} parent=1 // pred_region
      %1306 = dma.done [#allocation3], 1024
    $region37: #{tpu_custom_call.1} parent=1 // pred_fallthru
      _
    %1307 = vsyncpa [#allocation3], 1

</llo_original>
